<compile_context>
chip_gen: v5e
topology: v5e:2x2
jax: 0.10.0
libtpu: 0.0.40
codegen_flags: <defaults>
</compile_context>

<pallas_src>
import functools

import jax
import jax.numpy as jnp
from jax import lax
from jax.experimental import pallas as pl
from jax.experimental.pallas import tpu as pltpu


# ----------------------------------------------------------------------------
# Fused kernel: num_layers x LSTM + Linear(H, 1) head
# ----------------------------------------------------------------------------
def _make_fused_kernel(num_layers, seq_len):
    T = seq_len

    def kernel(*refs):
        x_ref = refs[0]                                     # (T*BB, D_in)
        layer_refs = refs[1:1 + 3 * num_layers]             # (w_ih_t, w_hh_t, bias)*L
        wlin_ref = refs[1 + 3 * num_layers]                 # (1, H)
        blin_ref = refs[2 + 3 * num_layers]                 # (1, 1)
        out_ref = refs[3 + 3 * num_layers]                  # (1, T*BB)
        gx_sc = refs[4 + 3 * num_layers]                    # (T*BB, 4H) VMEM scratch
        hseq_sc = refs[5 + 3 * num_layers]                  # (T*BB, H)  VMEM scratch

        H = hseq_sc.shape[1]
        BB = hseq_sc.shape[0] // T
        unroll = T if T <= 32 else 8                        # bound vreg pressure

        # sigmoid(x) = 0.5 * (1 + tanh(x / 2)).  Pre-scale the i/f/o gate
        # columns by 0.5 so the whole (BB, 4H) gate slab needs ONE tanh pass.
        col = lax.broadcasted_iota(jnp.int32, (1, 4 * H), 1)
        is_g = jnp.logical_and(col >= 2 * H, col < 3 * H)
        gate_scale = jnp.where(is_g, 1.0, 0.5)              # (1, 4H) f32

        def run_layer(wih_ref, whh_ref, b_ref, inp_2d):
            # Hoisted input projection + bias (+ tanh-identity pre-scale):
            # ONE (T*BB, Din)@(Din, 4H) matmul, off the per-step critical path.
            gx_sc[...] = (
                jnp.dot(inp_2d, wih_ref[...], preferred_element_type=jnp.float32)
                + b_ref[...]
            ) * gate_scale
            whh_s = whh_ref[...] * gate_scale               # (H, 4H), hoisted once

            def step(t, carry):
                h, c = carry                                # (BB, H) f32 values
                row = t * BB
                if BB % 8 == 0:                             # sublane-alignment hint
                    row = pl.multiple_of(row, BB)
                # Contiguous time-major gate slab for step t.
                gates = gx_sc[pl.ds(row, BB), :] + jnp.dot(
                    h, whh_s, preferred_element_type=jnp.float32)
                t_all = jnp.tanh(gates)                     # single full-width EUP pass
                i_g = 0.5 * t_all[:, 0 * H:1 * H] + 0.5     # sigmoid(i)
                f_g = 0.5 * t_all[:, 1 * H:2 * H] + 0.5     # sigmoid(f)
                g_g = t_all[:, 2 * H:3 * H]                 # tanh(g)
                o_g = 0.5 * t_all[:, 3 * H:4 * H] + 0.5     # sigmoid(o)
                c_new = f_g * c + i_g * g_g
                h_new = o_g * jnp.tanh(c_new)
                hseq_sc[pl.ds(row, BB), :] = h_new          # contiguous slab store
                return h_new, c_new

            zeros = jnp.zeros((BB, H), jnp.float32)
            lax.fori_loop(0, T, step, (zeros, zeros), unroll=unroll)

        inp = x_ref[...].astype(jnp.float32)                # (T*BB, D_in)
        for layer in range(num_layers):
            wih_ref, whh_ref, b_ref = layer_refs[3 * layer:3 * layer + 3]
            run_layer(wih_ref, whh_ref, b_ref, inp)
            if layer + 1 < num_layers:
                inp = hseq_sc[...]                          # layer output -> next input

        # Fused Linear(H, 1) head: ONE dot over the whole hidden sequence,
        # written with a single lane-dense (1, T*BB) store.
        y_row = lax.dot_general(
            wlin_ref[...], hseq_sc[...], (((1,), (1,)), ((), ())),
            preferred_element_type=jnp.float32) + blin_ref[...]
        out_ref[...] = y_row.astype(out_ref.dtype)

    return kernel


# ----------------------------------------------------------------------------
# Batch-block / device heuristics
# ----------------------------------------------------------------------------
def _tensorcores_per_device():
    """2 for megacore chips (v4 / v5p / v7x), else 1."""
    try:
        kind = jax.devices()[0].device_kind.lower()
    except Exception:
        return 1
    return 2 if any(tag in kind for tag in ("v4", "v5p", "7")) else 1


def _choose_batch_block(B, T, H, n_cores):
    divisors = [d for d in range(1, B + 1) if B % d == 0]
    BB = B
    if n_cores > 1:
        # Give each TensorCore at least one independent grid step.
        cands = [d for d in divisors if B // d >= n_cores]
        if cands:
            BB = max(cands)

    # Cap so per-block scratch comfortably fits the smallest scoped VMEM (v7x).
    def scratch_bytes(bb):
        rows = -(-T * bb // 8) * 8
        lanes = (-(-4 * H // 128) + (-(-H // 128))) * 128
        return rows * lanes * 4

    budget = 12 * 1024 * 1024
    while scratch_bytes(BB) > budget:
        smaller = [d for d in divisors if d < BB]
        if not smaller:
            # TODO(synk): for very long sequences, chunk the hoisted gate
            # projection over time instead of holding the full (T, 4H) slab.
            break
        BB = max(smaller)
    return BB


# ----------------------------------------------------------------------------
# Wrapper
# ----------------------------------------------------------------------------
@functools.partial(jax.jit, static_argnums=(2,))
def _forward_impl(x_btd, params, BB):
    B, T, D = x_btd.shape
    layers = params["layers"]
    num_layers = len(layers)
    H = layers[0]["w_hh_t"].shape[0]
    n_blocks = B // BB

    # Time-major layout per batch block: row = t*BB + b_local.
    x_tm = (x_btd.reshape(n_blocks, BB, T, D)
                 .transpose(0, 2, 1, 3)
                 .reshape(n_blocks, T * BB, D))

    in_specs = [pl.BlockSpec((None, T * BB, D), lambda i: (i, 0, 0))]
    args = [x_tm]
    for lp in layers:
        d_in = lp["w_ih_t"].shape[0]
        in_specs += [
            pl.BlockSpec((d_in, 4 * H), lambda i: (0, 0)),
            pl.BlockSpec((H, 4 * H), lambda i: (0, 0)),
            pl.BlockSpec((1, 4 * H), lambda i: (0, 0)),
        ]
        args += [lp["w_ih_t"], lp["w_hh_t"], lp["bias"]]
    in_specs += [
        pl.BlockSpec((1, H), lambda i: (0, 0)),
        pl.BlockSpec((1, 1), lambda i: (0, 0)),
    ]
    args += [params["linear_w"], params["linear_b"]]

    out_tm = pl.pallas_call(
        _make_fused_kernel(num_layers, T),
        out_shape=jax.ShapeDtypeStruct((n_blocks, 1, T * BB), jnp.float32),
        grid_spec=pltpu.PrefetchScalarGridSpec(
            num_scalar_prefetch=0,
            grid=(n_blocks,),
            in_specs=in_specs,
            out_specs=pl.BlockSpec((None, 1, T * BB), lambda i: (i, 0, 0)),
            scratch_shapes=[
                pltpu.VMEM((T * BB, 4 * H), jnp.float32),   # hoisted, pre-scaled gates
                pltpu.VMEM((T * BB, H), jnp.float32),       # per-layer hidden sequence
            ],
        ),
        compiler_params=pltpu.CompilerParams(
            # Independent batch blocks -> sharded across TensorCores where the
            # chip has more than one; harmless (grid may be (1,)) elsewhere.
            dimension_semantics=("parallel",),
            vmem_limit_bytes=32 * 1024 * 1024,
        ),
    )(*args)

    # (n_blocks, 1, T*BB) time-major -> (B, T, 1) batch_first.
    out = (out_tm.reshape(n_blocks, T, BB)
                 .transpose(0, 2, 1)
                 .reshape(B, T, 1))
    return out


def penny_stock_forward(x_btd, params, *, batch_block=None):
    """x_btd: (B, T, input_size) f32 -> (B, T, 1) f32 (== module.forward)."""
    B, T, _ = x_btd.shape
    H = params["layers"][0]["w_hh_t"].shape[0]
    BB = batch_block if batch_block is not None else _choose_batch_block(
        B, T, H, _tensorcores_per_device())
    assert B % BB == 0, "batch_block must divide the batch size"
    return _forward_impl(x_btd, params, BB)


# ----------------------------------------------------------------------------
# Parameters (PyTorch-style init) and a pure-JAX reference
# ----------------------------------------------------------------------------
def init_params(key, input_size, hidden_size, num_layers):
    k = 1.0 / (hidden_size ** 0.5)
    params = {"layers": []}
    for layer in range(num_layers):
        d_in = input_size if layer == 0 else hidden_size
        key, k1, k2, k3, k4 = jax.random.split(key, 5)
        w_ih = jax.random.uniform(k1, (4 * hidden_size, d_in), jnp.float32, -k, k)
        w_hh = jax.random.uniform(k2, (4 * hidden_size, hidden_size), jnp.float32, -k, k)
        b_ih = jax.random.uniform(k3, (4 * hidden_size,), jnp.float32, -k, k)
        b_hh = jax.random.uniform(k4, (4 * hidden_size,), jnp.float32, -k, k)
        params["layers"].append({
            "w_ih_t": w_ih.T,                                   # (D_in, 4H)
            "w_hh_t": w_hh.T,                                   # (H, 4H)
            "bias": (b_ih + b_hh).reshape(1, 4 * hidden_size),  # (1, 4H)
        })
    key, k1, k2 = jax.random.split(key, 3)
    params["linear_w"] = jax.random.uniform(k1, (1, hidden_size), jnp.float32, -k, k)
    params["linear_b"] = jax.random.uniform(k2, (1, 1), jnp.float32, -k, k)
    return params


def reference_forward(x_btd, params):
    """Pure-JAX nn.LSTM(batch_first) + nn.Linear reference."""
    B, T, _ = x_btd.shape
    h_seq = x_btd
    for lp in params["layers"]:
        H = lp["w_hh_t"].shape[0]
        wih, whh, bias = lp["w_ih_t"], lp["w_hh_t"], lp["bias"][0]
        h = jnp.zeros((B, H), jnp.float32)
        c = jnp.zeros((B, H), jnp.float32)
        hs = []
        for t in range(T):
            gates = h_seq[:, t, :] @ wih + h @ whh + bias
            i = jax.nn.sigmoid(gates[:, 0 * H:1 * H])
            f = jax.nn.sigmoid(gates[:, 1 * H:2 * H])
            g = jnp.tanh(gates[:, 2 * H:3 * H])
            o = jax.nn.sigmoid(gates[:, 3 * H:4 * H])
            c = f * c + i * g
            h = o * jnp.tanh(c)
            hs.append(h)
        h_seq = jnp.stack(hs, axis=1)
    y = jnp.einsum("bth,oh->bto", h_seq, params["linear_w"]) + params["linear_b"][0, 0]
    return y


# ----------------------------------------------------------------------------
if __name__ == "__main__":
    input_size, hidden_size, num_layers = 4, 32, 2
    batch, seq = 2, 8

    key = jax.random.PRNGKey(0)
    key, xkey, pkey = jax.random.split(key, 3)
    x = jax.random.normal(xkey, (batch, seq, input_size), jnp.float32)
    params = init_params(pkey, input_size, hidden_size, num_layers)

    out = penny_stock_forward(x, params)
    jax.block_until_ready(out)

    assert out.shape == (batch, seq, 1), out.shape
    assert out.dtype == jnp.float32

    ref = reference_forward(x, params)
    max_err = float(jnp.max(jnp.abs(out - ref)))
    assert max_err < 5e-3, f"kernel vs reference mismatch: max abs err {max_err}"

    print("KERNEL_OK")
</pallas_src>

<mosaic_0001>
module attributes {stable_mosaic.version = 11 : i64} {
  func.func @kernel(%arg0: i32, %arg1: memref<1x16x4xf32, #tpu.memory_space<vmem>>, %arg2: memref<4x128xf32, #tpu.memory_space<vmem>>, %arg3: memref<32x128xf32, #tpu.memory_space<vmem>>, %arg4: memref<1x128xf32, #tpu.memory_space<vmem>>, %arg5: memref<32x128xf32, #tpu.memory_space<vmem>>, %arg6: memref<32x128xf32, #tpu.memory_space<vmem>>, %arg7: memref<1x128xf32, #tpu.memory_space<vmem>>, %arg8: memref<1x32xf32, #tpu.memory_space<vmem>>, %arg9: memref<1x1xf32, #tpu.memory_space<vmem>>, %arg10: memref<1x1x16xf32, #tpu.memory_space<vmem>>, %arg11: memref<16x128xf32, #tpu.memory_space<vmem>>, %arg12: memref<16x32xf32, #tpu.memory_space<vmem>>) attributes {dimension_semantics = [#tpu.dimension_semantics<parallel>], iteration_bounds = array<i64: 1>, scalar_prefetch = 0 : i64, scratch_operands = 2 : i64, tpu.core_type = #tpu.core_type<tc>, window_params = [{transform_indices = @transform_0, window_bounds = array<i64: 1, 16, 4>}, {pipeline_mode = #tpu.pipeline_mode<synchronous>, transform_indices = @transform_1, window_bounds = array<i64: 4, 128>}, {pipeline_mode = #tpu.pipeline_mode<synchronous>, transform_indices = @transform_2, window_bounds = array<i64: 32, 128>}, {pipeline_mode = #tpu.pipeline_mode<synchronous>, transform_indices = @transform_3, window_bounds = array<i64: 1, 128>}, {pipeline_mode = #tpu.pipeline_mode<synchronous>, transform_indices = @transform_4, window_bounds = array<i64: 32, 128>}, {pipeline_mode = #tpu.pipeline_mode<synchronous>, transform_indices = @transform_5, window_bounds = array<i64: 32, 128>}, {pipeline_mode = #tpu.pipeline_mode<synchronous>, transform_indices = @transform_6, window_bounds = array<i64: 1, 128>}, {pipeline_mode = #tpu.pipeline_mode<synchronous>, transform_indices = @transform_7, window_bounds = array<i64: 1, 32>}, {pipeline_mode = #tpu.pipeline_mode<synchronous>, transform_indices = @transform_8, window_bounds = array<i64: 1, 1>}, {transform_indices = @transform_9, window_bounds = array<i64: 1, 1, 16>}]} {
    %0 = tpu.iota {dimensions = array<i32: 1>} : vector<1x128xi32>
    %c64_i32 = arith.constant 64 : i32
    %1 = vector.broadcast %c64_i32 : i32 to vector<1x128xi32>
    %2 = arith.cmpi sge, %0, %1 : vector<1x128xi32>
    %c96_i32 = arith.constant 96 : i32
    %3 = vector.broadcast %c96_i32 : i32 to vector<1x128xi32>
    %4 = arith.cmpi slt, %0, %3 : vector<1x128xi32>
    %5 = arith.andi %2, %4 : vector<1x128xi1>
    %cst = arith.constant 1.000000e+00 : f32
    %cst_0 = arith.constant 5.000000e-01 : f32
    %6 = vector.broadcast %cst : f32 to vector<1x128xf32>
    %7 = vector.broadcast %cst_0 : f32 to vector<1x128xf32>
    %8 = arith.select %5, %6, %7 : vector<1x128xi1>, vector<1x128xf32>
    %c0 = arith.constant 0 : index
    %c0_1 = arith.constant 0 : index
    %c0_2 = arith.constant 0 : index
    %9 = vector.load %arg1[%c0, %c0_1, %c0_2] : memref<1x16x4xf32, #tpu.memory_space<vmem>>, vector<1x16x4xf32>
    %10 = vector.shape_cast %9 : vector<1x16x4xf32> to vector<16x4xf32>
    %c0_3 = arith.constant 0 : index
    %c0_4 = arith.constant 0 : index
    %11 = vector.load %arg2[%c0_3, %c0_4] : memref<4x128xf32, #tpu.memory_space<vmem>>, vector<4x128xf32>
    %cst_5 = arith.constant dense<0.000000e+00> : vector<16x128xf32>
    %12 = tpu.matmul %10, %11, %cst_5 {dimension_numbers = #tpu.dot_dimension_numbers<[1], [0], [0], [1], [0, 0, 1, 1], [], []>} : vector<16x4xf32>, vector<4x128xf32>, vector<16x128xf32> -> vector<16x128xf32>
    %c0_6 = arith.constant 0 : index
    %c0_7 = arith.constant 0 : index
    %13 = vector.load %arg4[%c0_6, %c0_7] : memref<1x128xf32, #tpu.memory_space<vmem>>, vector<1x128xf32>
    %14 = vector.broadcast %13 : vector<1x128xf32> to vector<16x128xf32>
    %15 = arith.addf %12, %14 : vector<16x128xf32>
    %16 = vector.broadcast %8 : vector<1x128xf32> to vector<16x128xf32>
    %17 = arith.mulf %15, %16 : vector<16x128xf32>
    %c0_8 = arith.constant 0 : index
    %c0_9 = arith.constant 0 : index
    %18 = vector.load %arg11[%c0_8, %c0_9] : memref<16x128xf32, #tpu.memory_space<vmem>>, vector<16x128xf32>
    tpu.vector_store %arg11[%c0_8, %c0_9], %17 {strides = array<i32>} : memref<16x128xf32, #tpu.memory_space<vmem>>, vector<16x128xf32>,
    %c0_10 = arith.constant 0 : index
    %c0_11 = arith.constant 0 : index
    %19 = vector.load %arg3[%c0_10, %c0_11] : memref<32x128xf32, #tpu.memory_space<vmem>>, vector<32x128xf32>
    %20 = vector.broadcast %8 : vector<1x128xf32> to vector<32x128xf32>
    %21 = arith.mulf %19, %20 : vector<32x128xf32>
    %cst_12 = arith.constant 0.000000e+00 : f32
    %22 = vector.broadcast %cst_12 : f32 to vector<2x32xf32>
    %c0_i32 = arith.constant 0 : i32
    %c2_i32 = arith.constant 2 : i32
    %23 = arith.muli %c0_i32, %c2_i32 : i32
    %24 = arith.index_cast %23 : i32 to index
    %c0_13 = arith.constant 0 : index
    %25 = vector.load %arg11[%24, %c0_13] : memref<16x128xf32, #tpu.memory_space<vmem>>, vector<2x128xf32>
    %cst_14 = arith.constant dense<0.000000e+00> : vector<2x128xf32>
    %26 = tpu.matmul %22, %21, %cst_14 {dimension_numbers = #tpu.dot_dimension_numbers<[1], [0], [0], [1], [0, 0, 1, 1], [], []>} : vector<2x32xf32>, vector<32x128xf32>, vector<2x128xf32> -> vector<2x128xf32>
    %27 = arith.addf %25, %26 : vector<2x128xf32>
    %28 = math.tanh %27 : vector<2x128xf32>
    %29 = vector.extract_strided_slice %28 {offsets = [0, 0], sizes = [2, 32], strides = [1, 1]} : vector<2x128xf32> to vector<2x32xf32>
    %cst_15 = arith.constant 5.000000e-01 : f32
    %30 = vector.broadcast %cst_15 : f32 to vector<2x32xf32>
    %31 = arith.mulf %30, %29 : vector<2x32xf32>
    %cst_16 = arith.constant 5.000000e-01 : f32
    %32 = vector.broadcast %cst_16 : f32 to vector<2x32xf32>
    %33 = arith.addf %31, %32 : vector<2x32xf32>
    %34 = vector.extract_strided_slice %28 {offsets = [0, 32], sizes = [2, 32], strides = [1, 1]} : vector<2x128xf32> to vector<2x32xf32>
    %cst_17 = arith.constant 5.000000e-01 : f32
    %35 = vector.broadcast %cst_17 : f32 to vector<2x32xf32>
    %36 = arith.mulf %35, %34 : vector<2x32xf32>
    %cst_18 = arith.constant 5.000000e-01 : f32
    %37 = vector.broadcast %cst_18 : f32 to vector<2x32xf32>
    %38 = arith.addf %36, %37 : vector<2x32xf32>
    %39 = vector.extract_strided_slice %28 {offsets = [0, 64], sizes = [2, 32], strides = [1, 1]} : vector<2x128xf32> to vector<2x32xf32>
    %40 = vector.extract_strided_slice %28 {offsets = [0, 96], sizes = [2, 32], strides = [1, 1]} : vector<2x128xf32> to vector<2x32xf32>
    %cst_19 = arith.constant 5.000000e-01 : f32
    %41 = vector.broadcast %cst_19 : f32 to vector<2x32xf32>
    %42 = arith.mulf %41, %40 : vector<2x32xf32>
    %cst_20 = arith.constant 5.000000e-01 : f32
    %43 = vector.broadcast %cst_20 : f32 to vector<2x32xf32>
    %44 = arith.addf %42, %43 : vector<2x32xf32>
    %45 = arith.mulf %38, %22 : vector<2x32xf32>
    %46 = arith.mulf %33, %39 : vector<2x32xf32>
    %47 = arith.addf %45, %46 : vector<2x32xf32>
    %48 = math.tanh %47 : vector<2x32xf32>
    %49 = arith.mulf %44, %48 : vector<2x32xf32>
    %50 = arith.index_cast %23 : i32 to index
    %c0_21 = arith.constant 0 : index
    %51 = vector.load %arg12[%50, %c0_21] : memref<16x32xf32, #tpu.memory_space<vmem>>, vector<2x32xf32>
    tpu.vector_store %arg12[%50, %c0_21], %49 {strides = array<i32>} : memref<16x32xf32, #tpu.memory_space<vmem>>, vector<2x32xf32>,
    %c1_i32 = arith.constant 1 : i32
    %c2_i32_22 = arith.constant 2 : i32
    %52 = arith.muli %c1_i32, %c2_i32_22 : i32
    %53 = arith.index_cast %52 : i32 to index
    %c0_23 = arith.constant 0 : index
    %54 = vector.load %arg11[%53, %c0_23] : memref<16x128xf32, #tpu.memory_space<vmem>>, vector<2x128xf32>
    %cst_24 = arith.constant dense<0.000000e+00> : vector<2x128xf32>
    %55 = tpu.matmul %49, %21, %cst_24 {dimension_numbers = #tpu.dot_dimension_numbers<[1], [0], [0], [1], [0, 0, 1, 1], [], []>} : vector<2x32xf32>, vector<32x128xf32>, vector<2x128xf32> -> vector<2x128xf32>
    %56 = arith.addf %54, %55 : vector<2x128xf32>
    %57 = math.tanh %56 : vector<2x128xf32>
    %58 = vector.extract_strided_slice %57 {offsets = [0, 0], sizes = [2, 32], strides = [1, 1]} : vector<2x128xf32> to vector<2x32xf32>
    %cst_25 = arith.constant 5.000000e-01 : f32
    %59 = vector.broadcast %cst_25 : f32 to vector<2x32xf32>
    %60 = arith.mulf %59, %58 : vector<2x32xf32>
    %cst_26 = arith.constant 5.000000e-01 : f32
    %61 = vector.broadcast %cst_26 : f32 to vector<2x32xf32>
    %62 = arith.addf %60, %61 : vector<2x32xf32>
    %63 = vector.extract_strided_slice %57 {offsets = [0, 32], sizes = [2, 32], strides = [1, 1]} : vector<2x128xf32> to vector<2x32xf32>
    %cst_27 = arith.constant 5.000000e-01 : f32
    %64 = vector.broadcast %cst_27 : f32 to vector<2x32xf32>
    %65 = arith.mulf %64, %63 : vector<2x32xf32>
    %cst_28 = arith.constant 5.000000e-01 : f32
    %66 = vector.broadcast %cst_28 : f32 to vector<2x32xf32>
    %67 = arith.addf %65, %66 : vector<2x32xf32>
    %68 = vector.extract_strided_slice %57 {offsets = [0, 64], sizes = [2, 32], strides = [1, 1]} : vector<2x128xf32> to vector<2x32xf32>
    %69 = vector.extract_strided_slice %57 {offsets = [0, 96], sizes = [2, 32], strides = [1, 1]} : vector<2x128xf32> to vector<2x32xf32>
    %cst_29 = arith.constant 5.000000e-01 : f32
    %70 = vector.broadcast %cst_29 : f32 to vector<2x32xf32>
    %71 = arith.mulf %70, %69 : vector<2x32xf32>
    %cst_30 = arith.constant 5.000000e-01 : f32
    %72 = vector.broadcast %cst_30 : f32 to vector<2x32xf32>
    %73 = arith.addf %71, %72 : vector<2x32xf32>
    %74 = arith.mulf %67, %47 : vector<2x32xf32>
    %75 = arith.mulf %62, %68 : vector<2x32xf32>
    %76 = arith.addf %74, %75 : vector<2x32xf32>
    %77 = math.tanh %76 : vector<2x32xf32>
    %78 = arith.mulf %73, %77 : vector<2x32xf32>
    %79 = arith.index_cast %52 : i32 to index
    %c0_31 = arith.constant 0 : index
    %80 = vector.load %arg12[%79, %c0_31] : memref<16x32xf32, #tpu.memory_space<vmem>>, vector<2x32xf32>
    tpu.vector_store %arg12[%79, %c0_31], %78 {strides = array<i32>} : memref<16x32xf32, #tpu.memory_space<vmem>>, vector<2x32xf32>,
    %c2_i32_32 = arith.constant 2 : i32
    %c2_i32_33 = arith.constant 2 : i32
    %81 = arith.muli %c2_i32_32, %c2_i32_33 : i32
    %82 = arith.index_cast %81 : i32 to index
    %c0_34 = arith.constant 0 : index
    %83 = vector.load %arg11[%82, %c0_34] : memref<16x128xf32, #tpu.memory_space<vmem>>, vector<2x128xf32>
    %cst_35 = arith.constant dense<0.000000e+00> : vector<2x128xf32>
    %84 = tpu.matmul %78, %21, %cst_35 {dimension_numbers = #tpu.dot_dimension_numbers<[1], [0], [0], [1], [0, 0, 1, 1], [], []>} : vector<2x32xf32>, vector<32x128xf32>, vector<2x128xf32> -> vector<2x128xf32>
    %85 = arith.addf %83, %84 : vector<2x128xf32>
    %86 = math.tanh %85 : vector<2x128xf32>
    %87 = vector.extract_strided_slice %86 {offsets = [0, 0], sizes = [2, 32], strides = [1, 1]} : vector<2x128xf32> to vector<2x32xf32>
    %cst_36 = arith.constant 5.000000e-01 : f32
    %88 = vector.broadcast %cst_36 : f32 to vector<2x32xf32>
    %89 = arith.mulf %88, %87 : vector<2x32xf32>
    %cst_37 = arith.constant 5.000000e-01 : f32
    %90 = vector.broadcast %cst_37 : f32 to vector<2x32xf32>
    %91 = arith.addf %89, %90 : vector<2x32xf32>
    %92 = vector.extract_strided_slice %86 {offsets = [0, 32], sizes = [2, 32], strides = [1, 1]} : vector<2x128xf32> to vector<2x32xf32>
    %cst_38 = arith.constant 5.000000e-01 : f32
    %93 = vector.broadcast %cst_38 : f32 to vector<2x32xf32>
    %94 = arith.mulf %93, %92 : vector<2x32xf32>
    %cst_39 = arith.constant 5.000000e-01 : f32
    %95 = vector.broadcast %cst_39 : f32 to vector<2x32xf32>
    %96 = arith.addf %94, %95 : vector<2x32xf32>
    %97 = vector.extract_strided_slice %86 {offsets = [0, 64], sizes = [2, 32], strides = [1, 1]} : vector<2x128xf32> to vector<2x32xf32>
    %98 = vector.extract_strided_slice %86 {offsets = [0, 96], sizes = [2, 32], strides = [1, 1]} : vector<2x128xf32> to vector<2x32xf32>
    %cst_40 = arith.constant 5.000000e-01 : f32
    %99 = vector.broadcast %cst_40 : f32 to vector<2x32xf32>
    %100 = arith.mulf %99, %98 : vector<2x32xf32>
    %cst_41 = arith.constant 5.000000e-01 : f32
    %101 = vector.broadcast %cst_41 : f32 to vector<2x32xf32>
    %102 = arith.addf %100, %101 : vector<2x32xf32>
    %103 = arith.mulf %96, %76 : vector<2x32xf32>
    %104 = arith.mulf %91, %97 : vector<2x32xf32>
    %105 = arith.addf %103, %104 : vector<2x32xf32>
    %106 = math.tanh %105 : vector<2x32xf32>
    %107 = arith.mulf %102, %106 : vector<2x32xf32>
    %108 = arith.index_cast %81 : i32 to index
    %c0_42 = arith.constant 0 : index
    %109 = vector.load %arg12[%108, %c0_42] : memref<16x32xf32, #tpu.memory_space<vmem>>, vector<2x32xf32>
    tpu.vector_store %arg12[%108, %c0_42], %107 {strides = array<i32>} : memref<16x32xf32, #tpu.memory_space<vmem>>, vector<2x32xf32>,
    %c3_i32 = arith.constant 3 : i32
    %c2_i32_43 = arith.constant 2 : i32
    %110 = arith.muli %c3_i32, %c2_i32_43 : i32
    %111 = arith.index_cast %110 : i32 to index
    %c0_44 = arith.constant 0 : index
    %112 = vector.load %arg11[%111, %c0_44] : memref<16x128xf32, #tpu.memory_space<vmem>>, vector<2x128xf32>
    %cst_45 = arith.constant dense<0.000000e+00> : vector<2x128xf32>
    %113 = tpu.matmul %107, %21, %cst_45 {dimension_numbers = #tpu.dot_dimension_numbers<[1], [0], [0], [1], [0, 0, 1, 1], [], []>} : vector<2x32xf32>, vector<32x128xf32>, vector<2x128xf32> -> vector<2x128xf32>
    %114 = arith.addf %112, %113 : vector<2x128xf32>
    %115 = math.tanh %114 : vector<2x128xf32>
    %116 = vector.extract_strided_slice %115 {offsets = [0, 0], sizes = [2, 32], strides = [1, 1]} : vector<2x128xf32> to vector<2x32xf32>
    %cst_46 = arith.constant 5.000000e-01 : f32
    %117 = vector.broadcast %cst_46 : f32 to vector<2x32xf32>
    %118 = arith.mulf %117, %116 : vector<2x32xf32>
    %cst_47 = arith.constant 5.000000e-01 : f32
    %119 = vector.broadcast %cst_47 : f32 to vector<2x32xf32>
    %120 = arith.addf %118, %119 : vector<2x32xf32>
    %121 = vector.extract_strided_slice %115 {offsets = [0, 32], sizes = [2, 32], strides = [1, 1]} : vector<2x128xf32> to vector<2x32xf32>
    %cst_48 = arith.constant 5.000000e-01 : f32
    %122 = vector.broadcast %cst_48 : f32 to vector<2x32xf32>
    %123 = arith.mulf %122, %121 : vector<2x32xf32>
    %cst_49 = arith.constant 5.000000e-01 : f32
    %124 = vector.broadcast %cst_49 : f32 to vector<2x32xf32>
    %125 = arith.addf %123, %124 : vector<2x32xf32>
    %126 = vector.extract_strided_slice %115 {offsets = [0, 64], sizes = [2, 32], strides = [1, 1]} : vector<2x128xf32> to vector<2x32xf32>
    %127 = vector.extract_strided_slice %115 {offsets = [0, 96], sizes = [2, 32], strides = [1, 1]} : vector<2x128xf32> to vector<2x32xf32>
    %cst_50 = arith.constant 5.000000e-01 : f32
    %128 = vector.broadcast %cst_50 : f32 to vector<2x32xf32>
    %129 = arith.mulf %128, %127 : vector<2x32xf32>
    %cst_51 = arith.constant 5.000000e-01 : f32
    %130 = vector.broadcast %cst_51 : f32 to vector<2x32xf32>
    %131 = arith.addf %129, %130 : vector<2x32xf32>
    %132 = arith.mulf %125, %105 : vector<2x32xf32>
    %133 = arith.mulf %120, %126 : vector<2x32xf32>
    %134 = arith.addf %132, %133 : vector<2x32xf32>
    %135 = math.tanh %134 : vector<2x32xf32>
    %136 = arith.mulf %131, %135 : vector<2x32xf32>
    %137 = arith.index_cast %110 : i32 to index
    %c0_52 = arith.constant 0 : index
    %138 = vector.load %arg12[%137, %c0_52] : memref<16x32xf32, #tpu.memory_space<vmem>>, vector<2x32xf32>
    tpu.vector_store %arg12[%137, %c0_52], %136 {strides = array<i32>} : memref<16x32xf32, #tpu.memory_space<vmem>>, vector<2x32xf32>,
    %c4_i32 = arith.constant 4 : i32
    %c2_i32_53 = arith.constant 2 : i32
    %139 = arith.muli %c4_i32, %c2_i32_53 : i32
    %140 = arith.index_cast %139 : i32 to index
    %c0_54 = arith.constant 0 : index
    %141 = vector.load %arg11[%140, %c0_54] : memref<16x128xf32, #tpu.memory_space<vmem>>, vector<2x128xf32>
    %cst_55 = arith.constant dense<0.000000e+00> : vector<2x128xf32>
    %142 = tpu.matmul %136, %21, %cst_55 {dimension_numbers = #tpu.dot_dimension_numbers<[1], [0], [0], [1], [0, 0, 1, 1], [], []>} : vector<2x32xf32>, vector<32x128xf32>, vector<2x128xf32> -> vector<2x128xf32>
    %143 = arith.addf %141, %142 : vector<2x128xf32>
    %144 = math.tanh %143 : vector<2x128xf32>
    %145 = vector.extract_strided_slice %144 {offsets = [0, 0], sizes = [2, 32], strides = [1, 1]} : vector<2x128xf32> to vector<2x32xf32>
    %cst_56 = arith.constant 5.000000e-01 : f32
    %146 = vector.broadcast %cst_56 : f32 to vector<2x32xf32>
    %147 = arith.mulf %146, %145 : vector<2x32xf32>
    %cst_57 = arith.constant 5.000000e-01 : f32
    %148 = vector.broadcast %cst_57 : f32 to vector<2x32xf32>
    %149 = arith.addf %147, %148 : vector<2x32xf32>
    %150 = vector.extract_strided_slice %144 {offsets = [0, 32], sizes = [2, 32], strides = [1, 1]} : vector<2x128xf32> to vector<2x32xf32>
    %cst_58 = arith.constant 5.000000e-01 : f32
    %151 = vector.broadcast %cst_58 : f32 to vector<2x32xf32>
    %152 = arith.mulf %151, %150 : vector<2x32xf32>
    %cst_59 = arith.constant 5.000000e-01 : f32
    %153 = vector.broadcast %cst_59 : f32 to vector<2x32xf32>
    %154 = arith.addf %152, %153 : vector<2x32xf32>
    %155 = vector.extract_strided_slice %144 {offsets = [0, 64], sizes = [2, 32], strides = [1, 1]} : vector<2x128xf32> to vector<2x32xf32>
    %156 = vector.extract_strided_slice %144 {offsets = [0, 96], sizes = [2, 32], strides = [1, 1]} : vector<2x128xf32> to vector<2x32xf32>
    %cst_60 = arith.constant 5.000000e-01 : f32
    %157 = vector.broadcast %cst_60 : f32 to vector<2x32xf32>
    %158 = arith.mulf %157, %156 : vector<2x32xf32>
    %cst_61 = arith.constant 5.000000e-01 : f32
    %159 = vector.broadcast %cst_61 : f32 to vector<2x32xf32>
    %160 = arith.addf %158, %159 : vector<2x32xf32>
    %161 = arith.mulf %154, %134 : vector<2x32xf32>
    %162 = arith.mulf %149, %155 : vector<2x32xf32>
    %163 = arith.addf %161, %162 : vector<2x32xf32>
    %164 = math.tanh %163 : vector<2x32xf32>
    %165 = arith.mulf %160, %164 : vector<2x32xf32>
    %166 = arith.index_cast %139 : i32 to index
    %c0_62 = arith.constant 0 : index
    %167 = vector.load %arg12[%166, %c0_62] : memref<16x32xf32, #tpu.memory_space<vmem>>, vector<2x32xf32>
    tpu.vector_store %arg12[%166, %c0_62], %165 {strides = array<i32>} : memref<16x32xf32, #tpu.memory_space<vmem>>, vector<2x32xf32>,
    %c5_i32 = arith.constant 5 : i32
    %c2_i32_63 = arith.constant 2 : i32
    %168 = arith.muli %c5_i32, %c2_i32_63 : i32
    %169 = arith.index_cast %168 : i32 to index
    %c0_64 = arith.constant 0 : index
    %170 = vector.load %arg11[%169, %c0_64] : memref<16x128xf32, #tpu.memory_space<vmem>>, vector<2x128xf32>
    %cst_65 = arith.constant dense<0.000000e+00> : vector<2x128xf32>
    %171 = tpu.matmul %165, %21, %cst_65 {dimension_numbers = #tpu.dot_dimension_numbers<[1], [0], [0], [1], [0, 0, 1, 1], [], []>} : vector<2x32xf32>, vector<32x128xf32>, vector<2x128xf32> -> vector<2x128xf32>
    %172 = arith.addf %170, %171 : vector<2x128xf32>
    %173 = math.tanh %172 : vector<2x128xf32>
    %174 = vector.extract_strided_slice %173 {offsets = [0, 0], sizes = [2, 32], strides = [1, 1]} : vector<2x128xf32> to vector<2x32xf32>
    %cst_66 = arith.constant 5.000000e-01 : f32
    %175 = vector.broadcast %cst_66 : f32 to vector<2x32xf32>
    %176 = arith.mulf %175, %174 : vector<2x32xf32>
    %cst_67 = arith.constant 5.000000e-01 : f32
    %177 = vector.broadcast %cst_67 : f32 to vector<2x32xf32>
    %178 = arith.addf %176, %177 : vector<2x32xf32>
    %179 = vector.extract_strided_slice %173 {offsets = [0, 32], sizes = [2, 32], strides = [1, 1]} : vector<2x128xf32> to vector<2x32xf32>
    %cst_68 = arith.constant 5.000000e-01 : f32
    %180 = vector.broadcast %cst_68 : f32 to vector<2x32xf32>
    %181 = arith.mulf %180, %179 : vector<2x32xf32>
    %cst_69 = arith.constant 5.000000e-01 : f32
    %182 = vector.broadcast %cst_69 : f32 to vector<2x32xf32>
    %183 = arith.addf %181, %182 : vector<2x32xf32>
    %184 = vector.extract_strided_slice %173 {offsets = [0, 64], sizes = [2, 32], strides = [1, 1]} : vector<2x128xf32> to vector<2x32xf32>
    %185 = vector.extract_strided_slice %173 {offsets = [0, 96], sizes = [2, 32], strides = [1, 1]} : vector<2x128xf32> to vector<2x32xf32>
    %cst_70 = arith.constant 5.000000e-01 : f32
    %186 = vector.broadcast %cst_70 : f32 to vector<2x32xf32>
    %187 = arith.mulf %186, %185 : vector<2x32xf32>
    %cst_71 = arith.constant 5.000000e-01 : f32
    %188 = vector.broadcast %cst_71 : f32 to vector<2x32xf32>
    %189 = arith.addf %187, %188 : vector<2x32xf32>
    %190 = arith.mulf %183, %163 : vector<2x32xf32>
    %191 = arith.mulf %178, %184 : vector<2x32xf32>
    %192 = arith.addf %190, %191 : vector<2x32xf32>
    %193 = math.tanh %192 : vector<2x32xf32>
    %194 = arith.mulf %189, %193 : vector<2x32xf32>
    %195 = arith.index_cast %168 : i32 to index
    %c0_72 = arith.constant 0 : index
    %196 = vector.load %arg12[%195, %c0_72] : memref<16x32xf32, #tpu.memory_space<vmem>>, vector<2x32xf32>
    tpu.vector_store %arg12[%195, %c0_72], %194 {strides = array<i32>} : memref<16x32xf32, #tpu.memory_space<vmem>>, vector<2x32xf32>,
    %c6_i32 = arith.constant 6 : i32
    %c2_i32_73 = arith.constant 2 : i32
    %197 = arith.muli %c6_i32, %c2_i32_73 : i32
    %198 = arith.index_cast %197 : i32 to index
    %c0_74 = arith.constant 0 : index
    %199 = vector.load %arg11[%198, %c0_74] : memref<16x128xf32, #tpu.memory_space<vmem>>, vector<2x128xf32>
    %cst_75 = arith.constant dense<0.000000e+00> : vector<2x128xf32>
    %200 = tpu.matmul %194, %21, %cst_75 {dimension_numbers = #tpu.dot_dimension_numbers<[1], [0], [0], [1], [0, 0, 1, 1], [], []>} : vector<2x32xf32>, vector<32x128xf32>, vector<2x128xf32> -> vector<2x128xf32>
    %201 = arith.addf %199, %200 : vector<2x128xf32>
    %202 = math.tanh %201 : vector<2x128xf32>
    %203 = vector.extract_strided_slice %202 {offsets = [0, 0], sizes = [2, 32], strides = [1, 1]} : vector<2x128xf32> to vector<2x32xf32>
    %cst_76 = arith.constant 5.000000e-01 : f32
    %204 = vector.broadcast %cst_76 : f32 to vector<2x32xf32>
    %205 = arith.mulf %204, %203 : vector<2x32xf32>
    %cst_77 = arith.constant 5.000000e-01 : f32
    %206 = vector.broadcast %cst_77 : f32 to vector<2x32xf32>
    %207 = arith.addf %205, %206 : vector<2x32xf32>
    %208 = vector.extract_strided_slice %202 {offsets = [0, 32], sizes = [2, 32], strides = [1, 1]} : vector<2x128xf32> to vector<2x32xf32>
    %cst_78 = arith.constant 5.000000e-01 : f32
    %209 = vector.broadcast %cst_78 : f32 to vector<2x32xf32>
    %210 = arith.mulf %209, %208 : vector<2x32xf32>
    %cst_79 = arith.constant 5.000000e-01 : f32
    %211 = vector.broadcast %cst_79 : f32 to vector<2x32xf32>
    %212 = arith.addf %210, %211 : vector<2x32xf32>
    %213 = vector.extract_strided_slice %202 {offsets = [0, 64], sizes = [2, 32], strides = [1, 1]} : vector<2x128xf32> to vector<2x32xf32>
    %214 = vector.extract_strided_slice %202 {offsets = [0, 96], sizes = [2, 32], strides = [1, 1]} : vector<2x128xf32> to vector<2x32xf32>
    %cst_80 = arith.constant 5.000000e-01 : f32
    %215 = vector.broadcast %cst_80 : f32 to vector<2x32xf32>
    %216 = arith.mulf %215, %214 : vector<2x32xf32>
    %cst_81 = arith.constant 5.000000e-01 : f32
    %217 = vector.broadcast %cst_81 : f32 to vector<2x32xf32>
    %218 = arith.addf %216, %217 : vector<2x32xf32>
    %219 = arith.mulf %212, %192 : vector<2x32xf32>
    %220 = arith.mulf %207, %213 : vector<2x32xf32>
    %221 = arith.addf %219, %220 : vector<2x32xf32>
    %222 = math.tanh %221 : vector<2x32xf32>
    %223 = arith.mulf %218, %222 : vector<2x32xf32>
    %224 = arith.index_cast %197 : i32 to index
    %c0_82 = arith.constant 0 : index
    %225 = vector.load %arg12[%224, %c0_82] : memref<16x32xf32, #tpu.memory_space<vmem>>, vector<2x32xf32>
    tpu.vector_store %arg12[%224, %c0_82], %223 {strides = array<i32>} : memref<16x32xf32, #tpu.memory_space<vmem>>, vector<2x32xf32>,
    %c7_i32 = arith.constant 7 : i32
    %c2_i32_83 = arith.constant 2 : i32
    %226 = arith.muli %c7_i32, %c2_i32_83 : i32
    %227 = arith.index_cast %226 : i32 to index
    %c0_84 = arith.constant 0 : index
    %228 = vector.load %arg11[%227, %c0_84] : memref<16x128xf32, #tpu.memory_space<vmem>>, vector<2x128xf32>
    %cst_85 = arith.constant dense<0.000000e+00> : vector<2x128xf32>
    %229 = tpu.matmul %223, %21, %cst_85 {dimension_numbers = #tpu.dot_dimension_numbers<[1], [0], [0], [1], [0, 0, 1, 1], [], []>} : vector<2x32xf32>, vector<32x128xf32>, vector<2x128xf32> -> vector<2x128xf32>
    %230 = arith.addf %228, %229 : vector<2x128xf32>
    %231 = math.tanh %230 : vector<2x128xf32>
    %232 = vector.extract_strided_slice %231 {offsets = [0, 0], sizes = [2, 32], strides = [1, 1]} : vector<2x128xf32> to vector<2x32xf32>
    %cst_86 = arith.constant 5.000000e-01 : f32
    %233 = vector.broadcast %cst_86 : f32 to vector<2x32xf32>
    %234 = arith.mulf %233, %232 : vector<2x32xf32>
    %cst_87 = arith.constant 5.000000e-01 : f32
    %235 = vector.broadcast %cst_87 : f32 to vector<2x32xf32>
    %236 = arith.addf %234, %235 : vector<2x32xf32>
    %237 = vector.extract_strided_slice %231 {offsets = [0, 32], sizes = [2, 32], strides = [1, 1]} : vector<2x128xf32> to vector<2x32xf32>
    %cst_88 = arith.constant 5.000000e-01 : f32
    %238 = vector.broadcast %cst_88 : f32 to vector<2x32xf32>
    %239 = arith.mulf %238, %237 : vector<2x32xf32>
    %cst_89 = arith.constant 5.000000e-01 : f32
    %240 = vector.broadcast %cst_89 : f32 to vector<2x32xf32>
    %241 = arith.addf %239, %240 : vector<2x32xf32>
    %242 = vector.extract_strided_slice %231 {offsets = [0, 64], sizes = [2, 32], strides = [1, 1]} : vector<2x128xf32> to vector<2x32xf32>
    %243 = vector.extract_strided_slice %231 {offsets = [0, 96], sizes = [2, 32], strides = [1, 1]} : vector<2x128xf32> to vector<2x32xf32>
    %cst_90 = arith.constant 5.000000e-01 : f32
    %244 = vector.broadcast %cst_90 : f32 to vector<2x32xf32>
    %245 = arith.mulf %244, %243 : vector<2x32xf32>
    %cst_91 = arith.constant 5.000000e-01 : f32
    %246 = vector.broadcast %cst_91 : f32 to vector<2x32xf32>
    %247 = arith.addf %245, %246 : vector<2x32xf32>
    %248 = arith.mulf %241, %221 : vector<2x32xf32>
    %249 = arith.mulf %236, %242 : vector<2x32xf32>
    %250 = arith.addf %248, %249 : vector<2x32xf32>
    %251 = math.tanh %250 : vector<2x32xf32>
    %252 = arith.mulf %247, %251 : vector<2x32xf32>
    %253 = arith.index_cast %226 : i32 to index
    %c0_92 = arith.constant 0 : index
    %254 = vector.load %arg12[%253, %c0_92] : memref<16x32xf32, #tpu.memory_space<vmem>>, vector<2x32xf32>
    tpu.vector_store %arg12[%253, %c0_92], %252 {strides = array<i32>} : memref<16x32xf32, #tpu.memory_space<vmem>>, vector<2x32xf32>,
    %c8_i32 = arith.constant 8 : i32
    %c0_93 = arith.constant 0 : index
    %c0_94 = arith.constant 0 : index
    %255 = vector.load %arg12[%c0_93, %c0_94] : memref<16x32xf32, #tpu.memory_space<vmem>>, vector<16x32xf32>
    %c0_95 = arith.constant 0 : index
    %c0_96 = arith.constant 0 : index
    %256 = vector.load %arg5[%c0_95, %c0_96] : memref<32x128xf32, #tpu.memory_space<vmem>>, vector<32x128xf32>
    %cst_97 = arith.constant dense<0.000000e+00> : vector<16x128xf32>
    %257 = tpu.matmul %255, %256, %cst_97 {dimension_numbers = #tpu.dot_dimension_numbers<[1], [0], [0], [1], [0, 0, 1, 1], [], []>} : vector<16x32xf32>, vector<32x128xf32>, vector<16x128xf32> -> vector<16x128xf32>
    %c0_98 = arith.constant 0 : index
    %c0_99 = arith.constant 0 : index
    %258 = vector.load %arg7[%c0_98, %c0_99] : memref<1x128xf32, #tpu.memory_space<vmem>>, vector<1x128xf32>
    %259 = vector.broadcast %258 : vector<1x128xf32> to vector<16x128xf32>
    %260 = arith.addf %257, %259 : vector<16x128xf32>
    %261 = vector.broadcast %8 : vector<1x128xf32> to vector<16x128xf32>
    %262 = arith.mulf %260, %261 : vector<16x128xf32>
    %c0_100 = arith.constant 0 : index
    %c0_101 = arith.constant 0 : index
    %263 = vector.load %arg11[%c0_100, %c0_101] : memref<16x128xf32, #tpu.memory_space<vmem>>, vector<16x128xf32>
    tpu.vector_store %arg11[%c0_100, %c0_101], %262 {strides = array<i32>} : memref<16x128xf32, #tpu.memory_space<vmem>>, vector<16x128xf32>,
    %c0_102 = arith.constant 0 : index
    %c0_103 = arith.constant 0 : index
    %264 = vector.load %arg6[%c0_102, %c0_103] : memref<32x128xf32, #tpu.memory_space<vmem>>, vector<32x128xf32>
    %265 = vector.broadcast %8 : vector<1x128xf32> to vector<32x128xf32>
    %266 = arith.mulf %264, %265 : vector<32x128xf32>
    %cst_104 = arith.constant 0.000000e+00 : f32
    %267 = vector.broadcast %cst_104 : f32 to vector<2x32xf32>
    %c0_i32_105 = arith.constant 0 : i32
    %c2_i32_106 = arith.constant 2 : i32
    %268 = arith.muli %c0_i32_105, %c2_i32_106 : i32
    %269 = arith.index_cast %268 : i32 to index
    %c0_107 = arith.constant 0 : index
    %270 = vector.load %arg11[%269, %c0_107] : memref<16x128xf32, #tpu.memory_space<vmem>>, vector<2x128xf32>
    %cst_108 = arith.constant dense<0.000000e+00> : vector<2x128xf32>
    %271 = tpu.matmul %267, %266, %cst_108 {dimension_numbers = #tpu.dot_dimension_numbers<[1], [0], [0], [1], [0, 0, 1, 1], [], []>} : vector<2x32xf32>, vector<32x128xf32>, vector<2x128xf32> -> vector<2x128xf32>
    %272 = arith.addf %270, %271 : vector<2x128xf32>
    %273 = math.tanh %272 : vector<2x128xf32>
    %274 = vector.extract_strided_slice %273 {offsets = [0, 0], sizes = [2, 32], strides = [1, 1]} : vector<2x128xf32> to vector<2x32xf32>
    %cst_109 = arith.constant 5.000000e-01 : f32
    %275 = vector.broadcast %cst_109 : f32 to vector<2x32xf32>
    %276 = arith.mulf %275, %274 : vector<2x32xf32>
    %cst_110 = arith.constant 5.000000e-01 : f32
    %277 = vector.broadcast %cst_110 : f32 to vector<2x32xf32>
    %278 = arith.addf %276, %277 : vector<2x32xf32>
    %279 = vector.extract_strided_slice %273 {offsets = [0, 32], sizes = [2, 32], strides = [1, 1]} : vector<2x128xf32> to vector<2x32xf32>
    %cst_111 = arith.constant 5.000000e-01 : f32
    %280 = vector.broadcast %cst_111 : f32 to vector<2x32xf32>
    %281 = arith.mulf %280, %279 : vector<2x32xf32>
    %cst_112 = arith.constant 5.000000e-01 : f32
    %282 = vector.broadcast %cst_112 : f32 to vector<2x32xf32>
    %283 = arith.addf %281, %282 : vector<2x32xf32>
    %284 = vector.extract_strided_slice %273 {offsets = [0, 64], sizes = [2, 32], strides = [1, 1]} : vector<2x128xf32> to vector<2x32xf32>
    %285 = vector.extract_strided_slice %273 {offsets = [0, 96], sizes = [2, 32], strides = [1, 1]} : vector<2x128xf32> to vector<2x32xf32>
    %cst_113 = arith.constant 5.000000e-01 : f32
    %286 = vector.broadcast %cst_113 : f32 to vector<2x32xf32>
    %287 = arith.mulf %286, %285 : vector<2x32xf32>
    %cst_114 = arith.constant 5.000000e-01 : f32
    %288 = vector.broadcast %cst_114 : f32 to vector<2x32xf32>
    %289 = arith.addf %287, %288 : vector<2x32xf32>
    %290 = arith.mulf %283, %267 : vector<2x32xf32>
    %291 = arith.mulf %278, %284 : vector<2x32xf32>
    %292 = arith.addf %290, %291 : vector<2x32xf32>
    %293 = math.tanh %292 : vector<2x32xf32>
    %294 = arith.mulf %289, %293 : vector<2x32xf32>
    %295 = arith.index_cast %268 : i32 to index
    %c0_115 = arith.constant 0 : index
    %296 = vector.load %arg12[%295, %c0_115] : memref<16x32xf32, #tpu.memory_space<vmem>>, vector<2x32xf32>
    tpu.vector_store %arg12[%295, %c0_115], %294 {strides = array<i32>} : memref<16x32xf32, #tpu.memory_space<vmem>>, vector<2x32xf32>,
    %c1_i32_116 = arith.constant 1 : i32
    %c2_i32_117 = arith.constant 2 : i32
    %297 = arith.muli %c1_i32_116, %c2_i32_117 : i32
    %298 = arith.index_cast %297 : i32 to index
    %c0_118 = arith.constant 0 : index
    %299 = vector.load %arg11[%298, %c0_118] : memref<16x128xf32, #tpu.memory_space<vmem>>, vector<2x128xf32>
    %cst_119 = arith.constant dense<0.000000e+00> : vector<2x128xf32>
    %300 = tpu.matmul %294, %266, %cst_119 {dimension_numbers = #tpu.dot_dimension_numbers<[1], [0], [0], [1], [0, 0, 1, 1], [], []>} : vector<2x32xf32>, vector<32x128xf32>, vector<2x128xf32> -> vector<2x128xf32>
    %301 = arith.addf %299, %300 : vector<2x128xf32>
    %302 = math.tanh %301 : vector<2x128xf32>
    %303 = vector.extract_strided_slice %302 {offsets = [0, 0], sizes = [2, 32], strides = [1, 1]} : vector<2x128xf32> to vector<2x32xf32>
    %cst_120 = arith.constant 5.000000e-01 : f32
    %304 = vector.broadcast %cst_120 : f32 to vector<2x32xf32>
    %305 = arith.mulf %304, %303 : vector<2x32xf32>
    %cst_121 = arith.constant 5.000000e-01 : f32
    %306 = vector.broadcast %cst_121 : f32 to vector<2x32xf32>
    %307 = arith.addf %305, %306 : vector<2x32xf32>
    %308 = vector.extract_strided_slice %302 {offsets = [0, 32], sizes = [2, 32], strides = [1, 1]} : vector<2x128xf32> to vector<2x32xf32>
    %cst_122 = arith.constant 5.000000e-01 : f32
    %309 = vector.broadcast %cst_122 : f32 to vector<2x32xf32>
    %310 = arith.mulf %309, %308 : vector<2x32xf32>
    %cst_123 = arith.constant 5.000000e-01 : f32
    %311 = vector.broadcast %cst_123 : f32 to vector<2x32xf32>
    %312 = arith.addf %310, %311 : vector<2x32xf32>
    %313 = vector.extract_strided_slice %302 {offsets = [0, 64], sizes = [2, 32], strides = [1, 1]} : vector<2x128xf32> to vector<2x32xf32>
    %314 = vector.extract_strided_slice %302 {offsets = [0, 96], sizes = [2, 32], strides = [1, 1]} : vector<2x128xf32> to vector<2x32xf32>
    %cst_124 = arith.constant 5.000000e-01 : f32
    %315 = vector.broadcast %cst_124 : f32 to vector<2x32xf32>
    %316 = arith.mulf %315, %314 : vector<2x32xf32>
    %cst_125 = arith.constant 5.000000e-01 : f32
    %317 = vector.broadcast %cst_125 : f32 to vector<2x32xf32>
    %318 = arith.addf %316, %317 : vector<2x32xf32>
    %319 = arith.mulf %312, %292 : vector<2x32xf32>
    %320 = arith.mulf %307, %313 : vector<2x32xf32>
    %321 = arith.addf %319, %320 : vector<2x32xf32>
    %322 = math.tanh %321 : vector<2x32xf32>
    %323 = arith.mulf %318, %322 : vector<2x32xf32>
    %324 = arith.index_cast %297 : i32 to index
    %c0_126 = arith.constant 0 : index
    %325 = vector.load %arg12[%324, %c0_126] : memref<16x32xf32, #tpu.memory_space<vmem>>, vector<2x32xf32>
    tpu.vector_store %arg12[%324, %c0_126], %323 {strides = array<i32>} : memref<16x32xf32, #tpu.memory_space<vmem>>, vector<2x32xf32>,
    %c2_i32_127 = arith.constant 2 : i32
    %c2_i32_128 = arith.constant 2 : i32
    %326 = arith.muli %c2_i32_127, %c2_i32_128 : i32
    %327 = arith.index_cast %326 : i32 to index
    %c0_129 = arith.constant 0 : index
    %328 = vector.load %arg11[%327, %c0_129] : memref<16x128xf32, #tpu.memory_space<vmem>>, vector<2x128xf32>
    %cst_130 = arith.constant dense<0.000000e+00> : vector<2x128xf32>
    %329 = tpu.matmul %323, %266, %cst_130 {dimension_numbers = #tpu.dot_dimension_numbers<[1], [0], [0], [1], [0, 0, 1, 1], [], []>} : vector<2x32xf32>, vector<32x128xf32>, vector<2x128xf32> -> vector<2x128xf32>
    %330 = arith.addf %328, %329 : vector<2x128xf32>
    %331 = math.tanh %330 : vector<2x128xf32>
    %332 = vector.extract_strided_slice %331 {offsets = [0, 0], sizes = [2, 32], strides = [1, 1]} : vector<2x128xf32> to vector<2x32xf32>
    %cst_131 = arith.constant 5.000000e-01 : f32
    %333 = vector.broadcast %cst_131 : f32 to vector<2x32xf32>
    %334 = arith.mulf %333, %332 : vector<2x32xf32>
    %cst_132 = arith.constant 5.000000e-01 : f32
    %335 = vector.broadcast %cst_132 : f32 to vector<2x32xf32>
    %336 = arith.addf %334, %335 : vector<2x32xf32>
    %337 = vector.extract_strided_slice %331 {offsets = [0, 32], sizes = [2, 32], strides = [1, 1]} : vector<2x128xf32> to vector<2x32xf32>
    %cst_133 = arith.constant 5.000000e-01 : f32
    %338 = vector.broadcast %cst_133 : f32 to vector<2x32xf32>
    %339 = arith.mulf %338, %337 : vector<2x32xf32>
    %cst_134 = arith.constant 5.000000e-01 : f32
    %340 = vector.broadcast %cst_134 : f32 to vector<2x32xf32>
    %341 = arith.addf %339, %340 : vector<2x32xf32>
    %342 = vector.extract_strided_slice %331 {offsets = [0, 64], sizes = [2, 32], strides = [1, 1]} : vector<2x128xf32> to vector<2x32xf32>
    %343 = vector.extract_strided_slice %331 {offsets = [0, 96], sizes = [2, 32], strides = [1, 1]} : vector<2x128xf32> to vector<2x32xf32>
    %cst_135 = arith.constant 5.000000e-01 : f32
    %344 = vector.broadcast %cst_135 : f32 to vector<2x32xf32>
    %345 = arith.mulf %344, %343 : vector<2x32xf32>
    %cst_136 = arith.constant 5.000000e-01 : f32
    %346 = vector.broadcast %cst_136 : f32 to vector<2x32xf32>
    %347 = arith.addf %345, %346 : vector<2x32xf32>
    %348 = arith.mulf %341, %321 : vector<2x32xf32>
    %349 = arith.mulf %336, %342 : vector<2x32xf32>
    %350 = arith.addf %348, %349 : vector<2x32xf32>
    %351 = math.tanh %350 : vector<2x32xf32>
    %352 = arith.mulf %347, %351 : vector<2x32xf32>
    %353 = arith.index_cast %326 : i32 to index
    %c0_137 = arith.constant 0 : index
    %354 = vector.load %arg12[%353, %c0_137] : memref<16x32xf32, #tpu.memory_space<vmem>>, vector<2x32xf32>
    tpu.vector_store %arg12[%353, %c0_137], %352 {strides = array<i32>} : memref<16x32xf32, #tpu.memory_space<vmem>>, vector<2x32xf32>,
    %c3_i32_138 = arith.constant 3 : i32
    %c2_i32_139 = arith.constant 2 : i32
    %355 = arith.muli %c3_i32_138, %c2_i32_139 : i32
    %356 = arith.index_cast %355 : i32 to index
    %c0_140 = arith.constant 0 : index
    %357 = vector.load %arg11[%356, %c0_140] : memref<16x128xf32, #tpu.memory_space<vmem>>, vector<2x128xf32>
    %cst_141 = arith.constant dense<0.000000e+00> : vector<2x128xf32>
    %358 = tpu.matmul %352, %266, %cst_141 {dimension_numbers = #tpu.dot_dimension_numbers<[1], [0], [0], [1], [0, 0, 1, 1], [], []>} : vector<2x32xf32>, vector<32x128xf32>, vector<2x128xf32> -> vector<2x128xf32>
    %359 = arith.addf %357, %358 : vector<2x128xf32>
    %360 = math.tanh %359 : vector<2x128xf32>
    %361 = vector.extract_strided_slice %360 {offsets = [0, 0], sizes = [2, 32], strides = [1, 1]} : vector<2x128xf32> to vector<2x32xf32>
    %cst_142 = arith.constant 5.000000e-01 : f32
    %362 = vector.broadcast %cst_142 : f32 to vector<2x32xf32>
    %363 = arith.mulf %362, %361 : vector<2x32xf32>
    %cst_143 = arith.constant 5.000000e-01 : f32
    %364 = vector.broadcast %cst_143 : f32 to vector<2x32xf32>
    %365 = arith.addf %363, %364 : vector<2x32xf32>
    %366 = vector.extract_strided_slice %360 {offsets = [0, 32], sizes = [2, 32], strides = [1, 1]} : vector<2x128xf32> to vector<2x32xf32>
    %cst_144 = arith.constant 5.000000e-01 : f32
    %367 = vector.broadcast %cst_144 : f32 to vector<2x32xf32>
    %368 = arith.mulf %367, %366 : vector<2x32xf32>
    %cst_145 = arith.constant 5.000000e-01 : f32
    %369 = vector.broadcast %cst_145 : f32 to vector<2x32xf32>
    %370 = arith.addf %368, %369 : vector<2x32xf32>
    %371 = vector.extract_strided_slice %360 {offsets = [0, 64], sizes = [2, 32], strides = [1, 1]} : vector<2x128xf32> to vector<2x32xf32>
    %372 = vector.extract_strided_slice %360 {offsets = [0, 96], sizes = [2, 32], strides = [1, 1]} : vector<2x128xf32> to vector<2x32xf32>
    %cst_146 = arith.constant 5.000000e-01 : f32
    %373 = vector.broadcast %cst_146 : f32 to vector<2x32xf32>
    %374 = arith.mulf %373, %372 : vector<2x32xf32>
    %cst_147 = arith.constant 5.000000e-01 : f32
    %375 = vector.broadcast %cst_147 : f32 to vector<2x32xf32>
    %376 = arith.addf %374, %375 : vector<2x32xf32>
    %377 = arith.mulf %370, %350 : vector<2x32xf32>
    %378 = arith.mulf %365, %371 : vector<2x32xf32>
    %379 = arith.addf %377, %378 : vector<2x32xf32>
    %380 = math.tanh %379 : vector<2x32xf32>
    %381 = arith.mulf %376, %380 : vector<2x32xf32>
    %382 = arith.index_cast %355 : i32 to index
    %c0_148 = arith.constant 0 : index
    %383 = vector.load %arg12[%382, %c0_148] : memref<16x32xf32, #tpu.memory_space<vmem>>, vector<2x32xf32>
    tpu.vector_store %arg12[%382, %c0_148], %381 {strides = array<i32>} : memref<16x32xf32, #tpu.memory_space<vmem>>, vector<2x32xf32>,
    %c4_i32_149 = arith.constant 4 : i32
    %c2_i32_150 = arith.constant 2 : i32
    %384 = arith.muli %c4_i32_149, %c2_i32_150 : i32
    %385 = arith.index_cast %384 : i32 to index
    %c0_151 = arith.constant 0 : index
    %386 = vector.load %arg11[%385, %c0_151] : memref<16x128xf32, #tpu.memory_space<vmem>>, vector<2x128xf32>
    %cst_152 = arith.constant dense<0.000000e+00> : vector<2x128xf32>
    %387 = tpu.matmul %381, %266, %cst_152 {dimension_numbers = #tpu.dot_dimension_numbers<[1], [0], [0], [1], [0, 0, 1, 1], [], []>} : vector<2x32xf32>, vector<32x128xf32>, vector<2x128xf32> -> vector<2x128xf32>
    %388 = arith.addf %386, %387 : vector<2x128xf32>
    %389 = math.tanh %388 : vector<2x128xf32>
    %390 = vector.extract_strided_slice %389 {offsets = [0, 0], sizes = [2, 32], strides = [1, 1]} : vector<2x128xf32> to vector<2x32xf32>
    %cst_153 = arith.constant 5.000000e-01 : f32
    %391 = vector.broadcast %cst_153 : f32 to vector<2x32xf32>
    %392 = arith.mulf %391, %390 : vector<2x32xf32>
    %cst_154 = arith.constant 5.000000e-01 : f32
    %393 = vector.broadcast %cst_154 : f32 to vector<2x32xf32>
    %394 = arith.addf %392, %393 : vector<2x32xf32>
    %395 = vector.extract_strided_slice %389 {offsets = [0, 32], sizes = [2, 32], strides = [1, 1]} : vector<2x128xf32> to vector<2x32xf32>
    %cst_155 = arith.constant 5.000000e-01 : f32
    %396 = vector.broadcast %cst_155 : f32 to vector<2x32xf32>
    %397 = arith.mulf %396, %395 : vector<2x32xf32>
    %cst_156 = arith.constant 5.000000e-01 : f32
    %398 = vector.broadcast %cst_156 : f32 to vector<2x32xf32>
    %399 = arith.addf %397, %398 : vector<2x32xf32>
    %400 = vector.extract_strided_slice %389 {offsets = [0, 64], sizes = [2, 32], strides = [1, 1]} : vector<2x128xf32> to vector<2x32xf32>
    %401 = vector.extract_strided_slice %389 {offsets = [0, 96], sizes = [2, 32], strides = [1, 1]} : vector<2x128xf32> to vector<2x32xf32>
    %cst_157 = arith.constant 5.000000e-01 : f32
    %402 = vector.broadcast %cst_157 : f32 to vector<2x32xf32>
    %403 = arith.mulf %402, %401 : vector<2x32xf32>
    %cst_158 = arith.constant 5.000000e-01 : f32
    %404 = vector.broadcast %cst_158 : f32 to vector<2x32xf32>
    %405 = arith.addf %403, %404 : vector<2x32xf32>
    %406 = arith.mulf %399, %379 : vector<2x32xf32>
    %407 = arith.mulf %394, %400 : vector<2x32xf32>
    %408 = arith.addf %406, %407 : vector<2x32xf32>
    %409 = math.tanh %408 : vector<2x32xf32>
    %410 = arith.mulf %405, %409 : vector<2x32xf32>
    %411 = arith.index_cast %384 : i32 to index
    %c0_159 = arith.constant 0 : index
    %412 = vector.load %arg12[%411, %c0_159] : memref<16x32xf32, #tpu.memory_space<vmem>>, vector<2x32xf32>
    tpu.vector_store %arg12[%411, %c0_159], %410 {strides = array<i32>} : memref<16x32xf32, #tpu.memory_space<vmem>>, vector<2x32xf32>,
    %c5_i32_160 = arith.constant 5 : i32
    %c2_i32_161 = arith.constant 2 : i32
    %413 = arith.muli %c5_i32_160, %c2_i32_161 : i32
    %414 = arith.index_cast %413 : i32 to index
    %c0_162 = arith.constant 0 : index
    %415 = vector.load %arg11[%414, %c0_162] : memref<16x128xf32, #tpu.memory_space<vmem>>, vector<2x128xf32>
    %cst_163 = arith.constant dense<0.000000e+00> : vector<2x128xf32>
    %416 = tpu.matmul %410, %266, %cst_163 {dimension_numbers = #tpu.dot_dimension_numbers<[1], [0], [0], [1], [0, 0, 1, 1], [], []>} : vector<2x32xf32>, vector<32x128xf32>, vector<2x128xf32> -> vector<2x128xf32>
    %417 = arith.addf %415, %416 : vector<2x128xf32>
    %418 = math.tanh %417 : vector<2x128xf32>
    %419 = vector.extract_strided_slice %418 {offsets = [0, 0], sizes = [2, 32], strides = [1, 1]} : vector<2x128xf32> to vector<2x32xf32>
    %cst_164 = arith.constant 5.000000e-01 : f32
    %420 = vector.broadcast %cst_164 : f32 to vector<2x32xf32>
    %421 = arith.mulf %420, %419 : vector<2x32xf32>
    %cst_165 = arith.constant 5.000000e-01 : f32
    %422 = vector.broadcast %cst_165 : f32 to vector<2x32xf32>
    %423 = arith.addf %421, %422 : vector<2x32xf32>
    %424 = vector.extract_strided_slice %418 {offsets = [0, 32], sizes = [2, 32], strides = [1, 1]} : vector<2x128xf32> to vector<2x32xf32>
    %cst_166 = arith.constant 5.000000e-01 : f32
    %425 = vector.broadcast %cst_166 : f32 to vector<2x32xf32>
    %426 = arith.mulf %425, %424 : vector<2x32xf32>
    %cst_167 = arith.constant 5.000000e-01 : f32
    %427 = vector.broadcast %cst_167 : f32 to vector<2x32xf32>
    %428 = arith.addf %426, %427 : vector<2x32xf32>
    %429 = vector.extract_strided_slice %418 {offsets = [0, 64], sizes = [2, 32], strides = [1, 1]} : vector<2x128xf32> to vector<2x32xf32>
    %430 = vector.extract_strided_slice %418 {offsets = [0, 96], sizes = [2, 32], strides = [1, 1]} : vector<2x128xf32> to vector<2x32xf32>
    %cst_168 = arith.constant 5.000000e-01 : f32
    %431 = vector.broadcast %cst_168 : f32 to vector<2x32xf32>
    %432 = arith.mulf %431, %430 : vector<2x32xf32>
    %cst_169 = arith.constant 5.000000e-01 : f32
    %433 = vector.broadcast %cst_169 : f32 to vector<2x32xf32>
    %434 = arith.addf %432, %433 : vector<2x32xf32>
    %435 = arith.mulf %428, %408 : vector<2x32xf32>
    %436 = arith.mulf %423, %429 : vector<2x32xf32>
    %437 = arith.addf %435, %436 : vector<2x32xf32>
    %438 = math.tanh %437 : vector<2x32xf32>
    %439 = arith.mulf %434, %438 : vector<2x32xf32>
    %440 = arith.index_cast %413 : i32 to index
    %c0_170 = arith.constant 0 : index
    %441 = vector.load %arg12[%440, %c0_170] : memref<16x32xf32, #tpu.memory_space<vmem>>, vector<2x32xf32>
    tpu.vector_store %arg12[%440, %c0_170], %439 {strides = array<i32>} : memref<16x32xf32, #tpu.memory_space<vmem>>, vector<2x32xf32>,
    %c6_i32_171 = arith.constant 6 : i32
    %c2_i32_172 = arith.constant 2 : i32
    %442 = arith.muli %c6_i32_171, %c2_i32_172 : i32
    %443 = arith.index_cast %442 : i32 to index
    %c0_173 = arith.constant 0 : index
    %444 = vector.load %arg11[%443, %c0_173] : memref<16x128xf32, #tpu.memory_space<vmem>>, vector<2x128xf32>
    %cst_174 = arith.constant dense<0.000000e+00> : vector<2x128xf32>
    %445 = tpu.matmul %439, %266, %cst_174 {dimension_numbers = #tpu.dot_dimension_numbers<[1], [0], [0], [1], [0, 0, 1, 1], [], []>} : vector<2x32xf32>, vector<32x128xf32>, vector<2x128xf32> -> vector<2x128xf32>
    %446 = arith.addf %444, %445 : vector<2x128xf32>
    %447 = math.tanh %446 : vector<2x128xf32>
    %448 = vector.extract_strided_slice %447 {offsets = [0, 0], sizes = [2, 32], strides = [1, 1]} : vector<2x128xf32> to vector<2x32xf32>
    %cst_175 = arith.constant 5.000000e-01 : f32
    %449 = vector.broadcast %cst_175 : f32 to vector<2x32xf32>
    %450 = arith.mulf %449, %448 : vector<2x32xf32>
    %cst_176 = arith.constant 5.000000e-01 : f32
    %451 = vector.broadcast %cst_176 : f32 to vector<2x32xf32>
    %452 = arith.addf %450, %451 : vector<2x32xf32>
    %453 = vector.extract_strided_slice %447 {offsets = [0, 32], sizes = [2, 32], strides = [1, 1]} : vector<2x128xf32> to vector<2x32xf32>
    %cst_177 = arith.constant 5.000000e-01 : f32
    %454 = vector.broadcast %cst_177 : f32 to vector<2x32xf32>
    %455 = arith.mulf %454, %453 : vector<2x32xf32>
    %cst_178 = arith.constant 5.000000e-01 : f32
    %456 = vector.broadcast %cst_178 : f32 to vector<2x32xf32>
    %457 = arith.addf %455, %456 : vector<2x32xf32>
    %458 = vector.extract_strided_slice %447 {offsets = [0, 64], sizes = [2, 32], strides = [1, 1]} : vector<2x128xf32> to vector<2x32xf32>
    %459 = vector.extract_strided_slice %447 {offsets = [0, 96], sizes = [2, 32], strides = [1, 1]} : vector<2x128xf32> to vector<2x32xf32>
    %cst_179 = arith.constant 5.000000e-01 : f32
    %460 = vector.broadcast %cst_179 : f32 to vector<2x32xf32>
    %461 = arith.mulf %460, %459 : vector<2x32xf32>
    %cst_180 = arith.constant 5.000000e-01 : f32
    %462 = vector.broadcast %cst_180 : f32 to vector<2x32xf32>
    %463 = arith.addf %461, %462 : vector<2x32xf32>
    %464 = arith.mulf %457, %437 : vector<2x32xf32>
    %465 = arith.mulf %452, %458 : vector<2x32xf32>
    %466 = arith.addf %464, %465 : vector<2x32xf32>
    %467 = math.tanh %466 : vector<2x32xf32>
    %468 = arith.mulf %463, %467 : vector<2x32xf32>
    %469 = arith.index_cast %442 : i32 to index
    %c0_181 = arith.constant 0 : index
    %470 = vector.load %arg12[%469, %c0_181] : memref<16x32xf32, #tpu.memory_space<vmem>>, vector<2x32xf32>
    tpu.vector_store %arg12[%469, %c0_181], %468 {strides = array<i32>} : memref<16x32xf32, #tpu.memory_space<vmem>>, vector<2x32xf32>,
    %c7_i32_182 = arith.constant 7 : i32
    %c2_i32_183 = arith.constant 2 : i32
    %471 = arith.muli %c7_i32_182, %c2_i32_183 : i32
    %472 = arith.index_cast %471 : i32 to index
    %c0_184 = arith.constant 0 : index
    %473 = vector.load %arg11[%472, %c0_184] : memref<16x128xf32, #tpu.memory_space<vmem>>, vector<2x128xf32>
    %cst_185 = arith.constant dense<0.000000e+00> : vector<2x128xf32>
    %474 = tpu.matmul %468, %266, %cst_185 {dimension_numbers = #tpu.dot_dimension_numbers<[1], [0], [0], [1], [0, 0, 1, 1], [], []>} : vector<2x32xf32>, vector<32x128xf32>, vector<2x128xf32> -> vector<2x128xf32>
    %475 = arith.addf %473, %474 : vector<2x128xf32>
    %476 = math.tanh %475 : vector<2x128xf32>
    %477 = vector.extract_strided_slice %476 {offsets = [0, 0], sizes = [2, 32], strides = [1, 1]} : vector<2x128xf32> to vector<2x32xf32>
    %cst_186 = arith.constant 5.000000e-01 : f32
    %478 = vector.broadcast %cst_186 : f32 to vector<2x32xf32>
    %479 = arith.mulf %478, %477 : vector<2x32xf32>
    %cst_187 = arith.constant 5.000000e-01 : f32
    %480 = vector.broadcast %cst_187 : f32 to vector<2x32xf32>
    %481 = arith.addf %479, %480 : vector<2x32xf32>
    %482 = vector.extract_strided_slice %476 {offsets = [0, 32], sizes = [2, 32], strides = [1, 1]} : vector<2x128xf32> to vector<2x32xf32>
    %cst_188 = arith.constant 5.000000e-01 : f32
    %483 = vector.broadcast %cst_188 : f32 to vector<2x32xf32>
    %484 = arith.mulf %483, %482 : vector<2x32xf32>
    %cst_189 = arith.constant 5.000000e-01 : f32
    %485 = vector.broadcast %cst_189 : f32 to vector<2x32xf32>
    %486 = arith.addf %484, %485 : vector<2x32xf32>
    %487 = vector.extract_strided_slice %476 {offsets = [0, 64], sizes = [2, 32], strides = [1, 1]} : vector<2x128xf32> to vector<2x32xf32>
    %488 = vector.extract_strided_slice %476 {offsets = [0, 96], sizes = [2, 32], strides = [1, 1]} : vector<2x128xf32> to vector<2x32xf32>
    %cst_190 = arith.constant 5.000000e-01 : f32
    %489 = vector.broadcast %cst_190 : f32 to vector<2x32xf32>
    %490 = arith.mulf %489, %488 : vector<2x32xf32>
    %cst_191 = arith.constant 5.000000e-01 : f32
    %491 = vector.broadcast %cst_191 : f32 to vector<2x32xf32>
    %492 = arith.addf %490, %491 : vector<2x32xf32>
    %493 = arith.mulf %486, %466 : vector<2x32xf32>
    %494 = arith.mulf %481, %487 : vector<2x32xf32>
    %495 = arith.addf %493, %494 : vector<2x32xf32>
    %496 = math.tanh %495 : vector<2x32xf32>
    %497 = arith.mulf %492, %496 : vector<2x32xf32>
    %498 = arith.index_cast %471 : i32 to index
    %c0_192 = arith.constant 0 : index
    %499 = vector.load %arg12[%498, %c0_192] : memref<16x32xf32, #tpu.memory_space<vmem>>, vector<2x32xf32>
    tpu.vector_store %arg12[%498, %c0_192], %497 {strides = array<i32>} : memref<16x32xf32, #tpu.memory_space<vmem>>, vector<2x32xf32>,
    %c8_i32_193 = arith.constant 8 : i32
    %c0_194 = arith.constant 0 : index
    %c0_195 = arith.constant 0 : index
    %500 = vector.load %arg8[%c0_194, %c0_195] : memref<1x32xf32, #tpu.memory_space<vmem>>, vector<1x32xf32>
    %c0_196 = arith.constant 0 : index
    %c0_197 = arith.constant 0 : index
    %501 = vector.load %arg12[%c0_196, %c0_197] : memref<16x32xf32, #tpu.memory_space<vmem>>, vector<16x32xf32>
    %cst_198 = arith.constant dense<0.000000e+00> : vector<1x16xf32>
    %502 = tpu.matmul %500, %501, %cst_198 {dimension_numbers = #tpu.dot_dimension_numbers<[1], [1], [0], [0], [0, 0, 1, 0], [], []>} : vector<1x32xf32>, vector<16x32xf32>, vector<1x16xf32> -> vector<1x16xf32>
    %c0_199 = arith.constant 0 : index
    %c0_200 = arith.constant 0 : index
    %503 = vector.load %arg9[%c0_199, %c0_200] : memref<1x1xf32, #tpu.memory_space<vmem>>, vector<1x1xf32>
    %504 = vector.broadcast %503 : vector<1x1xf32> to vector<1x16xf32>
    %505 = arith.addf %502, %504 : vector<1x16xf32>
    %c0_201 = arith.constant 0 : index
    %c0_202 = arith.constant 0 : index
    %c0_203 = arith.constant 0 : index
    %506 = vector.load %arg10[%c0_201, %c0_202, %c0_203] : memref<1x1x16xf32, #tpu.memory_space<vmem>>, vector<1x1x16xf32>
    %507 = vector.shape_cast %506 : vector<1x1x16xf32> to vector<1x16xf32>
    %508 = vector.shape_cast %505 : vector<1x16xf32> to vector<1x1x16xf32>
    tpu.vector_store %arg10[%c0_201, %c0_202, %c0_203], %508 {strides = array<i32>} : memref<1x1x16xf32, #tpu.memory_space<vmem>>, vector<1x1x16xf32>,
    return
  }
  func.func @transform_0(%arg0: i32) -> (i32, i32, i32) {
    %c0_i32 = arith.constant 0 : i32
    %c0_i32_0 = arith.constant 0 : i32
    %c0_i32_1 = arith.constant 0 : i32
    return %arg0, %c0_i32, %c0_i32_0 : i32, i32, i32
  }
  func.func @transform_1(%arg0: i32) -> (i32, i32) {
    %c0_i32 = arith.constant 0 : i32
    %c0_i32_0 = arith.constant 0 : i32
    %c0_i32_1 = arith.constant 0 : i32
    return %c0_i32, %c0_i32_0 : i32, i32
  }
  func.func @transform_2(%arg0: i32) -> (i32, i32) {
    %c0_i32 = arith.constant 0 : i32
    %c0_i32_0 = arith.constant 0 : i32
    %c0_i32_1 = arith.constant 0 : i32
    return %c0_i32, %c0_i32_0 : i32, i32
  }
  func.func @transform_3(%arg0: i32) -> (i32, i32) {
    %c0_i32 = arith.constant 0 : i32
    %c0_i32_0 = arith.constant 0 : i32
    %c0_i32_1 = arith.constant 0 : i32
    return %c0_i32, %c0_i32_0 : i32, i32
  }
  func.func @transform_4(%arg0: i32) -> (i32, i32) {
    %c0_i32 = arith.constant 0 : i32
    %c0_i32_0 = arith.constant 0 : i32
    %c0_i32_1 = arith.constant 0 : i32
    return %c0_i32, %c0_i32_0 : i32, i32
  }
  func.func @transform_5(%arg0: i32) -> (i32, i32) {
    %c0_i32 = arith.constant 0 : i32
    %c0_i32_0 = arith.constant 0 : i32
    %c0_i32_1 = arith.constant 0 : i32
    return %c0_i32, %c0_i32_0 : i32, i32
  }
  func.func @transform_6(%arg0: i32) -> (i32, i32) {
    %c0_i32 = arith.constant 0 : i32
    %c0_i32_0 = arith.constant 0 : i32
    %c0_i32_1 = arith.constant 0 : i32
    return %c0_i32, %c0_i32_0 : i32, i32
  }
  func.func @transform_7(%arg0: i32) -> (i32, i32) {
    %c0_i32 = arith.constant 0 : i32
    %c0_i32_0 = arith.constant 0 : i32
    %c0_i32_1 = arith.constant 0 : i32
    return %c0_i32, %c0_i32_0 : i32, i32
  }
  func.func @transform_8(%arg0: i32) -> (i32, i32) {
    %c0_i32 = arith.constant 0 : i32
    %c0_i32_0 = arith.constant 0 : i32
    %c0_i32_1 = arith.constant 0 : i32
    return %c0_i32, %c0_i32_0 : i32, i32
  }
  func.func @transform_9(%arg0: i32) -> (i32, i32, i32) {
    %c0_i32 = arith.constant 0 : i32
    %c0_i32_0 = arith.constant 0 : i32
    %c0_i32_1 = arith.constant 0 : i32
    return %arg0, %c0_i32, %c0_i32_0 : i32, i32, i32
  }
}

</mosaic_0001>

<llo_original>
// kernel: _forward_impl.1
$region0: #{_forward_impl.1}
  #allocation0 [shape = 'u32[]', space=smem, size = 0x4, offset = 0x4, fixed_abs, tag = 'smem constant byte address 0x4 - core index']
  #allocation1 [shape = 'u32[72,128]{1,0:T(1,128)}', space=vmem, size = 0x9000, scoped, tag = 'internal scratch']
  #allocation2 [shape = 'f32[16,128]{1,0:T(8,128)}', space=vmem, size = 0x2000, scoped, tag = 'scratch operand']
  #allocation3 [shape = 'f32[16,32]{1,0:T(8,128)}', space=vmem, size = 0x2000, scoped, tag = 'scratch operand']
  #allocation4 [shape = 'f32[1,1]{1,0:T(1,128)S(1)}', space=vmem, size = 0x200, scoped, tag = 'scoped memory for _forward_impl.1']
  %s0 = inlined_call_operand.vmem [shape: f32[1,16,4], index: 0, kind: input, shape index: {}]
  %s1 = inlined_call_operand.vmem [shape: f32[4,128], index: 1, kind: input, shape index: {}]
  %s2 = inlined_call_operand.hbm [shape: f32[32,128], index: 2, kind: input, shape index: {}]
  %s3 = inlined_call_operand.vmem [shape: f32[1,128], index: 3, kind: input, shape index: {}]
  %s4 = inlined_call_operand.hbm [shape: f32[32,128], index: 4, kind: input, shape index: {}]
  %s5 = inlined_call_operand.hbm [shape: f32[32,128], index: 5, kind: input, shape index: {}]
  %s6 = inlined_call_operand.vmem [shape: f32[1,128], index: 6, kind: input, shape index: {}]
  %s7 = inlined_call_operand.vmem [shape: f32[1,32], index: 7, kind: input, shape index: {}]
  %s8 = inlined_call_operand.<no memory space> [shape: f32[1,1], index: 8, kind: input, shape index: {}]
  %s9 = inlined_call_operand.vmem [shape: f32[1,1,16], index: 9, kind: output, shape index: {}]
  %s10 = sld [smem:[#allocation0]]
  $region58: #{_forward_impl.1} parent=0
    _
  %s12 = ssub.s32 1, %s10
  %s13 = scalar_select 0, %s12, %s10
  %v14 = vstv %s8
  %15 = vst [vmem:[#allocation4] sm:$0x1] %v14
  $region1: #{_forward_impl.1} parent=0
    #allocation5 [shape = 'u8[16384]{0}', space=vmem, size = 0x4000, scoped, tag = 'input window, operand 2, single buffered']
    #allocation6 [shape = 's32[1]{0}', space=sflag, size = 0x4, scoped, tag = 'scoped memory for _forward_impl.1']
    #allocation7 [shape = 'u8[16384]{0}', space=vmem, size = 0x4000, scoped, tag = 'input window, operand 4, single buffered']
    #allocation8 [shape = 's32[1]{0}', space=sflag, size = 0x4, scoped, tag = 'scoped memory for _forward_impl.1']
    #allocation9 [shape = 'u8[16384]{0}', space=vmem, size = 0x4000, scoped, tag = 'input window, operand 5, single buffered']
    %16 = vsyncpa [#allocation6], 0
    %17 = vsyncpa [#allocation8], 0
    // Predicated region
    $region2: #{_forward_impl.1} parent=1 // pred_check
      _
    $region3: #{_forward_impl.1} parent=1 // pred_check_branch
      %19 = sbr.rel (0) target = $region5
    $region4: #{_forward_impl.1} parent=1 // pred_region
      _
    $region5: #{_forward_impl.1} parent=1 // pred_fallthru
      _
    // Predicated region
    $region6: #{_forward_impl.1} parent=1 // pred_check
      _
    $region7: #{_forward_impl.1} parent=1 // pred_check_branch
      %21 = sbr.rel (0) target = $region9
    $region8: #{_forward_impl.1} parent=1 // pred_region
      _
    $region9: #{_forward_impl.1} parent=1 // pred_fallthru
      _
    // Predicated region
    $region10: #{_forward_impl.1} parent=1 // pred_check
      _
    $region11: #{_forward_impl.1} parent=1 // pred_check_branch
      %23 = sbr.rel (0) target = $region13
    $region12: #{_forward_impl.1} parent=1 // pred_region
      %25 = vsyncadd [#allocation6], 0
      %s26 = sshll.u32 %s2, 4
      %s27 = int_to_ptr.hbm [resolvable:$true] %s26
      %s28 = sshll.u32 [#allocation5], 4
      %s29 = int_to_ptr.vmem [resolvable:$true] %s28
      %34 = dma.hbm_to_vmem [thread:$0]  %s27, 512, %s29, [#allocation6], 128, 128, 8
    $region13: #{_forward_impl.1} parent=1 // pred_fallthru
      _
    // Predicated region
    $region14: #{_forward_impl.1} parent=1 // pred_check
      _
    $region15: #{_forward_impl.1} parent=1 // pred_check_branch
      %36 = sbr.rel (0) target = $region17
    $region16: #{_forward_impl.1} parent=1 // pred_region
      _
    $region17: #{_forward_impl.1} parent=1 // pred_fallthru
      _
    // Predicated region
    $region18: #{_forward_impl.1} parent=1 // pred_check
      _
    $region19: #{_forward_impl.1} parent=1 // pred_check_branch
      %38 = sbr.rel (0) target = $region21
    $region20: #{_forward_impl.1} parent=1 // pred_region
      %40 = vsyncadd [#allocation8], 0
      %s41 = sshll.u32 %s4, 4
      %s42 = int_to_ptr.hbm [resolvable:$true] %s41
      %s43 = sshll.u32 [#allocation7], 4
      %s44 = int_to_ptr.vmem [resolvable:$true] %s43
      %49 = dma.hbm_to_vmem [thread:$0]  %s42, 512, %s44, [#allocation8], 128, 128, 8
    $region21: #{_forward_impl.1} parent=1 // pred_fallthru
      _
    // Predicated region
    $region22: #{_forward_impl.1} parent=1 // pred_check
      _
    $region23: #{_forward_impl.1} parent=1 // pred_check_branch
      %51 = sbr.rel (0) target = $region25
    $region24: #{_forward_impl.1} parent=1 // pred_region
      %53 = vsyncadd [#allocation8], 0
      %s54 = sshll.u32 %s5, 4
      %s55 = int_to_ptr.hbm [resolvable:$true] %s54
      %s56 = sshll.u32 [#allocation9], 4
      %s57 = int_to_ptr.vmem [resolvable:$true] %s56
      %62 = dma.hbm_to_vmem [thread:$0]  %s55, 512, %s57, [#allocation8], 128, 128, 8
    $region25: #{_forward_impl.1} parent=1 // pred_fallthru
      _
    // Predicated region
    $region26: #{_forward_impl.1} parent=1 // pred_check
      _
    $region27: #{_forward_impl.1} parent=1 // pred_check_branch
      %64 = sbr.rel (0) target = $region29
    $region28: #{_forward_impl.1} parent=1 // pred_region
      _
    $region29: #{_forward_impl.1} parent=1 // pred_fallthru
      _
    // Predicated region
    $region30: #{_forward_impl.1} parent=1 // pred_check
      _
    $region31: #{_forward_impl.1} parent=1 // pred_check_branch
      %66 = sbr.rel (0) target = $region33
    $region32: #{_forward_impl.1} parent=1 // pred_region
      _
    $region33: #{_forward_impl.1} parent=1 // pred_fallthru
      _
    // Predicated region
    $region34: #{_forward_impl.1} parent=1 // pred_check
      _
    $region35: #{_forward_impl.1} parent=1 // pred_check_branch
      %68 = sbr.rel (0) target = $region37
    $region36: #{_forward_impl.1} parent=1 // pred_region
      _
    $region37: #{_forward_impl.1} parent=1 // pred_fallthru
      _
    // Predicated region
    $region38: #{_forward_impl.1} parent=1 // pred_check
      _
    $region39: #{_forward_impl.1} parent=1 // pred_check_branch
      %70 = sbr.rel (0) target = $region41
    $region40: #{_forward_impl.1} parent=1 // pred_region
      %72 = dma.done [#allocation6], 512
    $region41: #{_forward_impl.1} parent=1 // pred_fallthru
      _
    // Predicated region
    $region42: #{_forward_impl.1} parent=1 // pred_check
      _
    $region43: #{_forward_impl.1} parent=1 // pred_check_branch
      %74 = sbr.rel (0) target = $region45
    $region44: #{_forward_impl.1} parent=1 // pred_region
      %76 = dma.done [#allocation8], 512
    $region45: #{_forward_impl.1} parent=1 // pred_fallthru
      _
    // Predicated region
    $region46: #{_forward_impl.1} parent=1 // pred_check
      _
    $region47: #{_forward_impl.1} parent=1 // pred_check_branch
      %78 = sbr.rel (0) target = $region49
    $region48: #{_forward_impl.1} parent=1 // pred_region
      %80 = dma.done [#allocation8], 512
    $region49: #{_forward_impl.1} parent=1 // pred_fallthru
      _
    %v81 = vlaneseq
    %v82 = vand.u32 %v81, 127
    %vm83 = vcmp.ge.s32.totalorder %v82, 64
    %vm84 = vcmp.lt.s32.totalorder %v82, 96
    %vm85 = vmand %vm83, %vm84
    %v86 = vsel %vm85, 1.0, 0.5
    %v87 = vld [vmem:[%s0] sm:$0xff]
    %v88 = vld [vmem:[%s0 + $0x8] sm:$0xff]
    %v89 = vld [vmem:[%s1] sm:$0xf]
    %v90 = vld [vmem:[%s3] sm:$0x1]
    %v92 = vperm.slane %v90, 0
    %vm94 = vcmask 31744
    %v96 = vsel %vm94, %v87, 0
    %v99 = vsel %vm94, %v88, 0
    %vm101 = vcmask 1043456
    %v103 = vsel %vm101, %v89, 0
    %105 = vmatpush.msra.mxu0 0.0
    %106 = vmatpush.msra.mxu0 0.0
    %107 = vmatpush.msra.mxu0 0.0
    %108 = vmatpush.msra.mxu0 0.0
    %109 = vmatpush.msra.mxu0 0.0
    %110 = vmatpush.msra.mxu0 0.0
    %111 = vmatpush.msra.mxu0 0.0
    %112 = vmatpush.msra.mxu0 0.0
    %113 = vmatpush.msra.mxu0 0.0
    %114 = vmatpush.msra.mxu0 0.0
    %115 = vmatpush.msra.mxu0 0.0
    %116 = vmatpush.msra.mxu0 0.0
    %117 = vmatpush.msra.mxu0 0.0
    %118 = vmatpush.msra.mxu0 0.0
    %119 = vmatpush.msra.mxu0 0.0
    %120 = vmatpush.msra.mxu0 %v103
    %121 = vmatmul.f32.gmra.mxu0 %v96
    %v122 = vpop.f32.mrf.mxu0
    %v123 = vadd.f32 %v92, %v122
    %124 = vmatmul.f32.gmra.mxu0 %v99
    %v125 = vpop.f32.mrf.mxu0
    %v126 = vadd.f32 %v92, %v125
    %127 = vdwg.mxu0
    %v128 = vmul.f32 %v123, %v86
    %v129 = vmul.f32 %v126, %v86
    %130 = vst [vmem:[#allocation2] sm:$0xff] %v128
    %131 = vst [vmem:[#allocation2 + $0x8] sm:$0xff] %v129
    %v132 = vld [vmem:[#allocation5] sm:$0xff]
    %v133 = vld [vmem:[#allocation5 + $0x8] sm:$0xff]
    %v134 = vld [vmem:[#allocation5 + $0x10] sm:$0xff]
    %v135 = vld [vmem:[#allocation5 + $0x18] sm:$0xff]
    %v136 = vmul.f32 %v132, %v86
    %v137 = vmul.f32 %v133, %v86
    %v138 = vmul.f32 %v134, %v86
    %v139 = vmul.f32 %v135, %v86
    %v140 = vld [vmem:[#allocation2] sm:$0x3]
    %vm141 = vcmask 261120
    %v143 = vsel %vm141, 0.0, 0
    %145 = vmatpush.msra.mxu0 0.0
    %146 = vmatpush.msra.mxu0 0.0
    %147 = vmatpush.msra.mxu0 0.0
    %148 = vmatpush.msra.mxu0 0.0
    %149 = vmatpush.msra.mxu0 0.0
    %150 = vmatpush.msra.mxu0 0.0
    %151 = vmatpush.msra.mxu0 0.0
    %152 = vmatpush.msra.mxu0 0.0
    %153 = vmatpush.msra.mxu0 0.0
    %154 = vmatpush.msra.mxu0 0.0
    %155 = vmatpush.msra.mxu0 0.0
    %156 = vmatpush.msra.mxu0 0.0
    %157 = vmatpush.msra.mxu0 %v139
    %158 = vmatpush.msra.mxu0 %v138
    %159 = vmatpush.msra.mxu0 %v137
    %160 = vmatpush.msra.mxu0 %v136
    %161 = vmatmul.f32.gmra.mxu0 %v143
    %v162 = vpop.f32.mrf.mxu0
    %v163 = vadd.f32 0.0, %v162
    %164 = vdwg.mxu0
    %v165 = vadd.f32 %v140, %v163
    %v166 = vtanh.pop %v165
    %v167 = vmul.f32 %v166, 0.5
    %v168 = vadd.f32 %v167, 0.5
    %v169 = vmul.f32 %v168, 0.0
    %171 = vrot.lane.b32.xlu0 %v166, 64
    %v172 = vpop.permute.xlu0 %171
    %v174 = vmul.f32 %v168, %v172
    %176 = vrot.lane.b32.xlu0 %v174, 32
    %v177 = vpop.permute.xlu0 %176
    %v179 = vadd.f32 %v169, %v177
    %v180 = vtanh.pop %v179
    %182 = vrot.lane.b32.xlu0 %v180, 64
    %v183 = vpop.permute.xlu0 %182
    %v185 = vmul.f32 %v168, %v183
    %187 = vrot.lane.b32.xlu0 %v185, 32
    %v188 = vpop.permute.xlu0 %187
    %vm190 = vcmask 254976
    %191 = vst.msk [vmem:[#allocation3] sm:$0x3] %vm190, %v188
    %v192 = vld [vmem:[#allocation2 + $0x2] sm:$0x3]
    %v193 = vsel %vm141, %v188, 0
    %195 = vmatpush.msra.mxu0 0.0
    %196 = vmatpush.msra.mxu0 0.0
    %197 = vmatpush.msra.mxu0 0.0
    %198 = vmatpush.msra.mxu0 0.0
    %199 = vmatpush.msra.mxu0 0.0
    %200 = vmatpush.msra.mxu0 0.0
    %201 = vmatpush.msra.mxu0 0.0
    %202 = vmatpush.msra.mxu0 0.0
    %203 = vmatpush.msra.mxu0 0.0
    %204 = vmatpush.msra.mxu0 0.0
    %205 = vmatpush.msra.mxu0 0.0
    %206 = vmatpush.msra.mxu0 0.0
    %207 = vmatpush.msra.mxu0 %v139
    %208 = vmatpush.msra.mxu0 %v138
    %209 = vmatpush.msra.mxu0 %v137
    %210 = vmatpush.msra.mxu0 %v136
    %211 = vmatmul.f32.gmra.mxu0 %v193
    %v212 = vpop.f32.mrf.mxu0
    %v213 = vadd.f32 0.0, %v212
    %214 = vdwg.mxu0
    %v215 = vadd.f32 %v192, %v213
    %v216 = vtanh.pop %v215
    %v217 = vmul.f32 %v216, 0.5
    %v218 = vadd.f32 %v217, 0.5
    %v219 = vmul.f32 %v218, %v179
    %221 = vrot.lane.b32.xlu0 %v216, 64
    %v222 = vpop.permute.xlu0 %221
    %v224 = vmul.f32 %v218, %v222
    %226 = vrot.lane.b32.xlu0 %v224, 32
    %v227 = vpop.permute.xlu0 %226
    %v229 = vadd.f32 %v219, %v227
    %v230 = vtanh.pop %v229
    %232 = vrot.lane.b32.xlu0 %v230, 64
    %v233 = vpop.permute.xlu0 %232
    %v235 = vmul.f32 %v218, %v233
    %237 = vrot.lane.b32.xlu0 %v235, 32
    %v238 = vpop.permute.xlu0 %237
    %240 = vst.msk [vmem:[#allocation3 + $0x2] sm:$0x3] %vm190, %v238
    %v241 = vld [vmem:[#allocation2 + $0x4] sm:$0x3]
    %v242 = vsel %vm141, %v238, 0
    %244 = vmatpush.msra.mxu0 0.0
    %245 = vmatpush.msra.mxu0 0.0
    %246 = vmatpush.msra.mxu0 0.0
    %247 = vmatpush.msra.mxu0 0.0
    %248 = vmatpush.msra.mxu0 0.0
    %249 = vmatpush.msra.mxu0 0.0
    %250 = vmatpush.msra.mxu0 0.0
    %251 = vmatpush.msra.mxu0 0.0
    %252 = vmatpush.msra.mxu0 0.0
    %253 = vmatpush.msra.mxu0 0.0
    %254 = vmatpush.msra.mxu0 0.0
    %255 = vmatpush.msra.mxu0 0.0
    %256 = vmatpush.msra.mxu0 %v139
    %257 = vmatpush.msra.mxu0 %v138
    %258 = vmatpush.msra.mxu0 %v137
    %259 = vmatpush.msra.mxu0 %v136
    %260 = vmatmul.f32.gmra.mxu0 %v242
    %v261 = vpop.f32.mrf.mxu0
    %v262 = vadd.f32 0.0, %v261
    %263 = vdwg.mxu0
    %v264 = vadd.f32 %v241, %v262
    %v265 = vtanh.pop %v264
    %v266 = vmul.f32 %v265, 0.5
    %v267 = vadd.f32 %v266, 0.5
    %v268 = vmul.f32 %v267, %v229
    %270 = vrot.lane.b32.xlu0 %v265, 64
    %v271 = vpop.permute.xlu0 %270
    %v273 = vmul.f32 %v267, %v271
    %275 = vrot.lane.b32.xlu0 %v273, 32
    %v276 = vpop.permute.xlu0 %275
    %v278 = vadd.f32 %v268, %v276
    %v279 = vtanh.pop %v278
    %281 = vrot.lane.b32.xlu0 %v279, 64
    %v282 = vpop.permute.xlu0 %281
    %v284 = vmul.f32 %v267, %v282
    %286 = vrot.lane.b32.xlu0 %v284, 32
    %v287 = vpop.permute.xlu0 %286
    %289 = vst.msk [vmem:[#allocation3 + $0x4] sm:$0x3] %vm190, %v287
    %v290 = vld [vmem:[#allocation2 + $0x6] sm:$0x3]
    %v291 = vsel %vm141, %v287, 0
    %293 = vmatpush.msra.mxu0 0.0
    %294 = vmatpush.msra.mxu0 0.0
    %295 = vmatpush.msra.mxu0 0.0
    %296 = vmatpush.msra.mxu0 0.0
    %297 = vmatpush.msra.mxu0 0.0
    %298 = vmatpush.msra.mxu0 0.0
    %299 = vmatpush.msra.mxu0 0.0
    %300 = vmatpush.msra.mxu0 0.0
    %301 = vmatpush.msra.mxu0 0.0
    %302 = vmatpush.msra.mxu0 0.0
    %303 = vmatpush.msra.mxu0 0.0
    %304 = vmatpush.msra.mxu0 0.0
    %305 = vmatpush.msra.mxu0 %v139
    %306 = vmatpush.msra.mxu0 %v138
    %307 = vmatpush.msra.mxu0 %v137
    %308 = vmatpush.msra.mxu0 %v136
    %309 = vmatmul.f32.gmra.mxu0 %v291
    %v310 = vpop.f32.mrf.mxu0
    %v311 = vadd.f32 0.0, %v310
    %312 = vdwg.mxu0
    %v313 = vadd.f32 %v290, %v311
    %v314 = vtanh.pop %v313
    %v315 = vmul.f32 %v314, 0.5
    %v316 = vadd.f32 %v315, 0.5
    %v317 = vmul.f32 %v316, %v278
    %319 = vrot.lane.b32.xlu0 %v314, 64
    %v320 = vpop.permute.xlu0 %319
    %v322 = vmul.f32 %v316, %v320
    %324 = vrot.lane.b32.xlu0 %v322, 32
    %v325 = vpop.permute.xlu0 %324
    %v327 = vadd.f32 %v317, %v325
    %v328 = vtanh.pop %v327
    %330 = vrot.lane.b32.xlu0 %v328, 64
    %v331 = vpop.permute.xlu0 %330
    %v333 = vmul.f32 %v316, %v331
    %335 = vrot.lane.b32.xlu0 %v333, 32
    %v336 = vpop.permute.xlu0 %335
    %338 = vst.msk [vmem:[#allocation3 + $0x6] sm:$0x3] %vm190, %v336
    %v339 = vld [vmem:[#allocation2 + $0x8] sm:$0x3]
    %v340 = vsel %vm141, %v336, 0
    %342 = vmatpush.msra.mxu0 0.0
    %343 = vmatpush.msra.mxu0 0.0
    %344 = vmatpush.msra.mxu0 0.0
    %345 = vmatpush.msra.mxu0 0.0
    %346 = vmatpush.msra.mxu0 0.0
    %347 = vmatpush.msra.mxu0 0.0
    %348 = vmatpush.msra.mxu0 0.0
    %349 = vmatpush.msra.mxu0 0.0
    %350 = vmatpush.msra.mxu0 0.0
    %351 = vmatpush.msra.mxu0 0.0
    %352 = vmatpush.msra.mxu0 0.0
    %353 = vmatpush.msra.mxu0 0.0
    %354 = vmatpush.msra.mxu0 %v139
    %355 = vmatpush.msra.mxu0 %v138
    %356 = vmatpush.msra.mxu0 %v137
    %357 = vmatpush.msra.mxu0 %v136
    %358 = vmatmul.f32.gmra.mxu0 %v340
    %v359 = vpop.f32.mrf.mxu0
    %v360 = vadd.f32 0.0, %v359
    %361 = vdwg.mxu0
    %v362 = vadd.f32 %v339, %v360
    %v363 = vtanh.pop %v362
    %v364 = vmul.f32 %v363, 0.5
    %v365 = vadd.f32 %v364, 0.5
    %v366 = vmul.f32 %v365, %v327
    %368 = vrot.lane.b32.xlu0 %v363, 64
    %v369 = vpop.permute.xlu0 %368
    %v371 = vmul.f32 %v365, %v369
    %373 = vrot.lane.b32.xlu0 %v371, 32
    %v374 = vpop.permute.xlu0 %373
    %v376 = vadd.f32 %v366, %v374
    %v377 = vtanh.pop %v376
    %379 = vrot.lane.b32.xlu0 %v377, 64
    %v380 = vpop.permute.xlu0 %379
    %v382 = vmul.f32 %v365, %v380
    %384 = vrot.lane.b32.xlu0 %v382, 32
    %v385 = vpop.permute.xlu0 %384
    %387 = vst.msk [vmem:[#allocation3 + $0x8] sm:$0x3] %vm190, %v385
    %v388 = vld [vmem:[#allocation2 + $0xa] sm:$0x3]
    %v389 = vsel %vm141, %v385, 0
    %391 = vmatpush.msra.mxu0 0.0
    %392 = vmatpush.msra.mxu0 0.0
    %393 = vmatpush.msra.mxu0 0.0
    %394 = vmatpush.msra.mxu0 0.0
    %395 = vmatpush.msra.mxu0 0.0
    %396 = vmatpush.msra.mxu0 0.0
    %397 = vmatpush.msra.mxu0 0.0
    %398 = vmatpush.msra.mxu0 0.0
    %399 = vmatpush.msra.mxu0 0.0
    %400 = vmatpush.msra.mxu0 0.0
    %401 = vmatpush.msra.mxu0 0.0
    %402 = vmatpush.msra.mxu0 0.0
    %403 = vmatpush.msra.mxu0 %v139
    %404 = vmatpush.msra.mxu0 %v138
    %405 = vmatpush.msra.mxu0 %v137
    %406 = vmatpush.msra.mxu0 %v136
    %407 = vmatmul.f32.gmra.mxu0 %v389
    %v408 = vpop.f32.mrf.mxu0
    %v409 = vadd.f32 0.0, %v408
    %410 = vdwg.mxu0
    %v411 = vadd.f32 %v388, %v409
    %v412 = vtanh.pop %v411
    %v413 = vmul.f32 %v412, 0.5
    %v414 = vadd.f32 %v413, 0.5
    %v415 = vmul.f32 %v414, %v376
    %417 = vrot.lane.b32.xlu0 %v412, 64
    %v418 = vpop.permute.xlu0 %417
    %v420 = vmul.f32 %v414, %v418
    %422 = vrot.lane.b32.xlu0 %v420, 32
    %v423 = vpop.permute.xlu0 %422
    %v425 = vadd.f32 %v415, %v423
    %v426 = vtanh.pop %v425
    %428 = vrot.lane.b32.xlu0 %v426, 64
    %v429 = vpop.permute.xlu0 %428
    %v431 = vmul.f32 %v414, %v429
    %433 = vrot.lane.b32.xlu0 %v431, 32
    %v434 = vpop.permute.xlu0 %433
    %436 = vst.msk [vmem:[#allocation3 + $0xa] sm:$0x3] %vm190, %v434
    %v437 = vld [vmem:[#allocation2 + $0xc] sm:$0x3]
    %v438 = vsel %vm141, %v434, 0
    %440 = vmatpush.msra.mxu0 0.0
    %441 = vmatpush.msra.mxu0 0.0
    %442 = vmatpush.msra.mxu0 0.0
    %443 = vmatpush.msra.mxu0 0.0
    %444 = vmatpush.msra.mxu0 0.0
    %445 = vmatpush.msra.mxu0 0.0
    %446 = vmatpush.msra.mxu0 0.0
    %447 = vmatpush.msra.mxu0 0.0
    %448 = vmatpush.msra.mxu0 0.0
    %449 = vmatpush.msra.mxu0 0.0
    %450 = vmatpush.msra.mxu0 0.0
    %451 = vmatpush.msra.mxu0 0.0
    %452 = vmatpush.msra.mxu0 %v139
    %453 = vmatpush.msra.mxu0 %v138
    %454 = vmatpush.msra.mxu0 %v137
    %455 = vmatpush.msra.mxu0 %v136
    %456 = vmatmul.f32.gmra.mxu0 %v438
    %v457 = vpop.f32.mrf.mxu0
    %v458 = vadd.f32 0.0, %v457
    %459 = vdwg.mxu0
    %v460 = vadd.f32 %v437, %v458
    %v461 = vtanh.pop %v460
    %v462 = vmul.f32 %v461, 0.5
    %v463 = vadd.f32 %v462, 0.5
    %v464 = vmul.f32 %v463, %v425
    %466 = vrot.lane.b32.xlu0 %v461, 64
    %v467 = vpop.permute.xlu0 %466
    %v469 = vmul.f32 %v463, %v467
    %471 = vrot.lane.b32.xlu0 %v469, 32
    %v472 = vpop.permute.xlu0 %471
    %v474 = vadd.f32 %v464, %v472
    %v475 = vtanh.pop %v474
    %477 = vrot.lane.b32.xlu0 %v475, 64
    %v478 = vpop.permute.xlu0 %477
    %v480 = vmul.f32 %v463, %v478
    %482 = vrot.lane.b32.xlu0 %v480, 32
    %v483 = vpop.permute.xlu0 %482
    %485 = vst.msk [vmem:[#allocation3 + $0xc] sm:$0x3] %vm190, %v483
    %v486 = vld [vmem:[#allocation2 + $0xe] sm:$0x3]
    %v487 = vsel %vm141, %v483, 0
    %489 = vmatpush.msra.mxu0 0.0
    %490 = vmatpush.msra.mxu0 0.0
    %491 = vmatpush.msra.mxu0 0.0
    %492 = vmatpush.msra.mxu0 0.0
    %493 = vmatpush.msra.mxu0 0.0
    %494 = vmatpush.msra.mxu0 0.0
    %495 = vmatpush.msra.mxu0 0.0
    %496 = vmatpush.msra.mxu0 0.0
    %497 = vmatpush.msra.mxu0 0.0
    %498 = vmatpush.msra.mxu0 0.0
    %499 = vmatpush.msra.mxu0 0.0
    %500 = vmatpush.msra.mxu0 0.0
    %501 = vmatpush.msra.mxu0 %v139
    %502 = vmatpush.msra.mxu0 %v138
    %503 = vmatpush.msra.mxu0 %v137
    %504 = vmatpush.msra.mxu0 %v136
    %505 = vmatmul.f32.gmra.mxu0 %v487
    %v506 = vpop.f32.mrf.mxu0
    %v507 = vadd.f32 0.0, %v506
    %508 = vdwg.mxu0
    %v509 = vadd.f32 %v486, %v507
    %v510 = vtanh.pop %v509
    %v511 = vmul.f32 %v510, 0.5
    %v512 = vadd.f32 %v511, 0.5
    %v513 = vmul.f32 %v512, %v474
    %515 = vrot.lane.b32.xlu0 %v510, 64
    %v516 = vpop.permute.xlu0 %515
    %v518 = vmul.f32 %v512, %v516
    %520 = vrot.lane.b32.xlu0 %v518, 32
    %v521 = vpop.permute.xlu0 %520
    %v523 = vadd.f32 %v513, %v521
    %v524 = vtanh.pop %v523
    %526 = vrot.lane.b32.xlu0 %v524, 64
    %v527 = vpop.permute.xlu0 %526
    %v529 = vmul.f32 %v512, %v527
    %531 = vrot.lane.b32.xlu0 %v529, 32
    %v532 = vpop.permute.xlu0 %531
    %534 = vst.msk [vmem:[#allocation3 + $0xe] sm:$0x3] %vm190, %v532
    %v535 = vld [vmem:[#allocation3] sm:$0xff]
    %v536 = vld [vmem:[#allocation3 + $0x8] sm:$0xff]
    %v537 = vld [vmem:[#allocation7] sm:$0xff]
    %v538 = vld [vmem:[#allocation7 + $0x8] sm:$0xff]
    %v539 = vld [vmem:[#allocation7 + $0x10] sm:$0xff]
    %v540 = vld [vmem:[#allocation7 + $0x18] sm:$0xff]
    %v541 = vld [vmem:[%s6] sm:$0x1]
    %v543 = vperm.slane %v541, 0
    %v546 = vsel %vm141, %v535, 0
    %v549 = vsel %vm141, %v536, 0
    %551 = vmatpush.msra.mxu0 0.0
    %552 = vmatpush.msra.mxu0 0.0
    %553 = vmatpush.msra.mxu0 0.0
    %554 = vmatpush.msra.mxu0 0.0
    %555 = vmatpush.msra.mxu0 0.0
    %556 = vmatpush.msra.mxu0 0.0
    %557 = vmatpush.msra.mxu0 0.0
    %558 = vmatpush.msra.mxu0 0.0
    %559 = vmatpush.msra.mxu0 0.0
    %560 = vmatpush.msra.mxu0 0.0
    %561 = vmatpush.msra.mxu0 0.0
    %562 = vmatpush.msra.mxu0 0.0
    %563 = vmatpush.msra.mxu0 %v540
    %564 = vmatpush.msra.mxu0 %v539
    %565 = vmatpush.msra.mxu0 %v538
    %566 = vmatpush.msra.mxu0 %v537
    %567 = vmatmul.f32.gmra.mxu0 %v546
    %v568 = vpop.f32.mrf.mxu0
    %v569 = vadd.f32 %v543, %v568
    %570 = vmatmul.f32.gmra.mxu0 %v549
    %v571 = vpop.f32.mrf.mxu0
    %v572 = vadd.f32 %v543, %v571
    %573 = vdwg.mxu0
    %v574 = vmul.f32 %v569, %v86
    %v575 = vmul.f32 %v572, %v86
    %576 = vst [vmem:[#allocation2] sm:$0xff] %v574
    %577 = vst [vmem:[#allocation2 + $0x8] sm:$0xff] %v575
    %v578 = vld [vmem:[#allocation9] sm:$0xff]
    %v579 = vld [vmem:[#allocation9 + $0x8] sm:$0xff]
    %v580 = vld [vmem:[#allocation9 + $0x10] sm:$0xff]
    %v581 = vld [vmem:[#allocation9 + $0x18] sm:$0xff]
    %v582 = vmul.f32 %v578, %v86
    %v583 = vmul.f32 %v579, %v86
    %v584 = vmul.f32 %v580, %v86
    %v585 = vmul.f32 %v581, %v86
    %v586 = vld [vmem:[#allocation2] sm:$0x3]
    %587 = vmatpush.msra.mxu0 0.0
    %588 = vmatpush.msra.mxu0 0.0
    %589 = vmatpush.msra.mxu0 0.0
    %590 = vmatpush.msra.mxu0 0.0
    %591 = vmatpush.msra.mxu0 0.0
    %592 = vmatpush.msra.mxu0 0.0
    %593 = vmatpush.msra.mxu0 0.0
    %594 = vmatpush.msra.mxu0 0.0
    %595 = vmatpush.msra.mxu0 0.0
    %596 = vmatpush.msra.mxu0 0.0
    %597 = vmatpush.msra.mxu0 0.0
    %598 = vmatpush.msra.mxu0 0.0
    %599 = vmatpush.msra.mxu0 %v585
    %600 = vmatpush.msra.mxu0 %v584
    %601 = vmatpush.msra.mxu0 %v583
    %602 = vmatpush.msra.mxu0 %v582
    %603 = vmatmul.f32.gmra.mxu0 %v143
    %v604 = vpop.f32.mrf.mxu0
    %v605 = vadd.f32 0.0, %v604
    %606 = vdwg.mxu0
    %v607 = vadd.f32 %v586, %v605
    %v608 = vtanh.pop %v607
    %v609 = vmul.f32 %v608, 0.5
    %v610 = vadd.f32 %v609, 0.5
    %v611 = vmul.f32 %v610, 0.0
    %613 = vrot.lane.b32.xlu0 %v608, 64
    %v614 = vpop.permute.xlu0 %613
    %v616 = vmul.f32 %v610, %v614
    %618 = vrot.lane.b32.xlu0 %v616, 32
    %v619 = vpop.permute.xlu0 %618
    %v621 = vadd.f32 %v611, %v619
    %v622 = vtanh.pop %v621
    %624 = vrot.lane.b32.xlu0 %v622, 64
    %v625 = vpop.permute.xlu0 %624
    %v627 = vmul.f32 %v610, %v625
    %629 = vrot.lane.b32.xlu0 %v627, 32
    %v630 = vpop.permute.xlu0 %629
    %632 = vst.msk [vmem:[#allocation3] sm:$0x3] %vm190, %v630
    %v633 = vld [vmem:[#allocation2 + $0x2] sm:$0x3]
    %v634 = vsel %vm141, %v630, 0
    %636 = vmatpush.msra.mxu0 0.0
    %637 = vmatpush.msra.mxu0 0.0
    %638 = vmatpush.msra.mxu0 0.0
    %639 = vmatpush.msra.mxu0 0.0
    %640 = vmatpush.msra.mxu0 0.0
    %641 = vmatpush.msra.mxu0 0.0
    %642 = vmatpush.msra.mxu0 0.0
    %643 = vmatpush.msra.mxu0 0.0
    %644 = vmatpush.msra.mxu0 0.0
    %645 = vmatpush.msra.mxu0 0.0
    %646 = vmatpush.msra.mxu0 0.0
    %647 = vmatpush.msra.mxu0 0.0
    %648 = vmatpush.msra.mxu0 %v585
    %649 = vmatpush.msra.mxu0 %v584
    %650 = vmatpush.msra.mxu0 %v583
    %651 = vmatpush.msra.mxu0 %v582
    %652 = vmatmul.f32.gmra.mxu0 %v634
    %v653 = vpop.f32.mrf.mxu0
    %v654 = vadd.f32 0.0, %v653
    %655 = vdwg.mxu0
    %v656 = vadd.f32 %v633, %v654
    %v657 = vtanh.pop %v656
    %v658 = vmul.f32 %v657, 0.5
    %v659 = vadd.f32 %v658, 0.5
    %v660 = vmul.f32 %v659, %v621
    %662 = vrot.lane.b32.xlu0 %v657, 64
    %v663 = vpop.permute.xlu0 %662
    %v665 = vmul.f32 %v659, %v663
    %667 = vrot.lane.b32.xlu0 %v665, 32
    %v668 = vpop.permute.xlu0 %667
    %v670 = vadd.f32 %v660, %v668
    %v671 = vtanh.pop %v670
    %673 = vrot.lane.b32.xlu0 %v671, 64
    %v674 = vpop.permute.xlu0 %673
    %v676 = vmul.f32 %v659, %v674
    %678 = vrot.lane.b32.xlu0 %v676, 32
    %v679 = vpop.permute.xlu0 %678
    %681 = vst.msk [vmem:[#allocation3 + $0x2] sm:$0x3] %vm190, %v679
    %v682 = vld [vmem:[#allocation2 + $0x4] sm:$0x3]
    %v683 = vsel %vm141, %v679, 0
    %685 = vmatpush.msra.mxu0 0.0
    %686 = vmatpush.msra.mxu0 0.0
    %687 = vmatpush.msra.mxu0 0.0
    %688 = vmatpush.msra.mxu0 0.0
    %689 = vmatpush.msra.mxu0 0.0
    %690 = vmatpush.msra.mxu0 0.0
    %691 = vmatpush.msra.mxu0 0.0
    %692 = vmatpush.msra.mxu0 0.0
    %693 = vmatpush.msra.mxu0 0.0
    %694 = vmatpush.msra.mxu0 0.0
    %695 = vmatpush.msra.mxu0 0.0
    %696 = vmatpush.msra.mxu0 0.0
    %697 = vmatpush.msra.mxu0 %v585
    %698 = vmatpush.msra.mxu0 %v584
    %699 = vmatpush.msra.mxu0 %v583
    %700 = vmatpush.msra.mxu0 %v582
    %701 = vmatmul.f32.gmra.mxu0 %v683
    %v702 = vpop.f32.mrf.mxu0
    %v703 = vadd.f32 0.0, %v702
    %704 = vdwg.mxu0
    %v705 = vadd.f32 %v682, %v703
    %v706 = vtanh.pop %v705
    %v707 = vmul.f32 %v706, 0.5
    %v708 = vadd.f32 %v707, 0.5
    %v709 = vmul.f32 %v708, %v670
    %711 = vrot.lane.b32.xlu0 %v706, 64
    %v712 = vpop.permute.xlu0 %711
    %v714 = vmul.f32 %v708, %v712
    %716 = vrot.lane.b32.xlu0 %v714, 32
    %v717 = vpop.permute.xlu0 %716
    %v719 = vadd.f32 %v709, %v717
    %v720 = vtanh.pop %v719
    %722 = vrot.lane.b32.xlu0 %v720, 64
    %v723 = vpop.permute.xlu0 %722
    %v725 = vmul.f32 %v708, %v723
    %727 = vrot.lane.b32.xlu0 %v725, 32
    %v728 = vpop.permute.xlu0 %727
    %730 = vst.msk [vmem:[#allocation3 + $0x4] sm:$0x3] %vm190, %v728
    %v731 = vld [vmem:[#allocation2 + $0x6] sm:$0x3]
    %v732 = vsel %vm141, %v728, 0
    %734 = vmatpush.msra.mxu0 0.0
    %735 = vmatpush.msra.mxu0 0.0
    %736 = vmatpush.msra.mxu0 0.0
    %737 = vmatpush.msra.mxu0 0.0
    %738 = vmatpush.msra.mxu0 0.0
    %739 = vmatpush.msra.mxu0 0.0
    %740 = vmatpush.msra.mxu0 0.0
    %741 = vmatpush.msra.mxu0 0.0
    %742 = vmatpush.msra.mxu0 0.0
    %743 = vmatpush.msra.mxu0 0.0
    %744 = vmatpush.msra.mxu0 0.0
    %745 = vmatpush.msra.mxu0 0.0
    %746 = vmatpush.msra.mxu0 %v585
    %747 = vmatpush.msra.mxu0 %v584
    %748 = vmatpush.msra.mxu0 %v583
    %749 = vmatpush.msra.mxu0 %v582
    %750 = vmatmul.f32.gmra.mxu0 %v732
    %v751 = vpop.f32.mrf.mxu0
    %v752 = vadd.f32 0.0, %v751
    %753 = vdwg.mxu0
    %v754 = vadd.f32 %v731, %v752
    %v755 = vtanh.pop %v754
    %v756 = vmul.f32 %v755, 0.5
    %v757 = vadd.f32 %v756, 0.5
    %v758 = vmul.f32 %v757, %v719
    %760 = vrot.lane.b32.xlu0 %v755, 64
    %v761 = vpop.permute.xlu0 %760
    %v763 = vmul.f32 %v757, %v761
    %765 = vrot.lane.b32.xlu0 %v763, 32
    %v766 = vpop.permute.xlu0 %765
    %v768 = vadd.f32 %v758, %v766
    %v769 = vtanh.pop %v768
    %771 = vrot.lane.b32.xlu0 %v769, 64
    %v772 = vpop.permute.xlu0 %771
    %v774 = vmul.f32 %v757, %v772
    %776 = vrot.lane.b32.xlu0 %v774, 32
    %v777 = vpop.permute.xlu0 %776
    %779 = vst.msk [vmem:[#allocation3 + $0x6] sm:$0x3] %vm190, %v777
    %v780 = vld [vmem:[#allocation2 + $0x8] sm:$0x3]
    %v781 = vsel %vm141, %v777, 0
    %783 = vmatpush.msra.mxu0 0.0
    %784 = vmatpush.msra.mxu0 0.0
    %785 = vmatpush.msra.mxu0 0.0
    %786 = vmatpush.msra.mxu0 0.0
    %787 = vmatpush.msra.mxu0 0.0
    %788 = vmatpush.msra.mxu0 0.0
    %789 = vmatpush.msra.mxu0 0.0
    %790 = vmatpush.msra.mxu0 0.0
    %791 = vmatpush.msra.mxu0 0.0
    %792 = vmatpush.msra.mxu0 0.0
    %793 = vmatpush.msra.mxu0 0.0
    %794 = vmatpush.msra.mxu0 0.0
    %795 = vmatpush.msra.mxu0 %v585
    %796 = vmatpush.msra.mxu0 %v584
    %797 = vmatpush.msra.mxu0 %v583
    %798 = vmatpush.msra.mxu0 %v582
    %799 = vmatmul.f32.gmra.mxu0 %v781
    %v800 = vpop.f32.mrf.mxu0
    %v801 = vadd.f32 0.0, %v800
    %802 = vdwg.mxu0
    %v803 = vadd.f32 %v780, %v801
    %v804 = vtanh.pop %v803
    %v805 = vmul.f32 %v804, 0.5
    %v806 = vadd.f32 %v805, 0.5
    %v807 = vmul.f32 %v806, %v768
    %809 = vrot.lane.b32.xlu0 %v804, 64
    %v810 = vpop.permute.xlu0 %809
    %v812 = vmul.f32 %v806, %v810
    %814 = vrot.lane.b32.xlu0 %v812, 32
    %v815 = vpop.permute.xlu0 %814
    %v817 = vadd.f32 %v807, %v815
    %v818 = vtanh.pop %v817
    %820 = vrot.lane.b32.xlu0 %v818, 64
    %v821 = vpop.permute.xlu0 %820
    %v823 = vmul.f32 %v806, %v821
    %825 = vrot.lane.b32.xlu0 %v823, 32
    %v826 = vpop.permute.xlu0 %825
    %828 = vst.msk [vmem:[#allocation3 + $0x8] sm:$0x3] %vm190, %v826
    %v829 = vld [vmem:[#allocation2 + $0xa] sm:$0x3]
    %v830 = vsel %vm141, %v826, 0
    %832 = vmatpush.msra.mxu0 0.0
    %833 = vmatpush.msra.mxu0 0.0
    %834 = vmatpush.msra.mxu0 0.0
    %835 = vmatpush.msra.mxu0 0.0
    %836 = vmatpush.msra.mxu0 0.0
    %837 = vmatpush.msra.mxu0 0.0
    %838 = vmatpush.msra.mxu0 0.0
    %839 = vmatpush.msra.mxu0 0.0
    %840 = vmatpush.msra.mxu0 0.0
    %841 = vmatpush.msra.mxu0 0.0
    %842 = vmatpush.msra.mxu0 0.0
    %843 = vmatpush.msra.mxu0 0.0
    %844 = vmatpush.msra.mxu0 %v585
    %845 = vmatpush.msra.mxu0 %v584
    %846 = vmatpush.msra.mxu0 %v583
    %847 = vmatpush.msra.mxu0 %v582
    %848 = vmatmul.f32.gmra.mxu0 %v830
    %v849 = vpop.f32.mrf.mxu0
    %v850 = vadd.f32 0.0, %v849
    %851 = vdwg.mxu0
    %v852 = vadd.f32 %v829, %v850
    %v853 = vtanh.pop %v852
    %v854 = vmul.f32 %v853, 0.5
    %v855 = vadd.f32 %v854, 0.5
    %v856 = vmul.f32 %v855, %v817
    %858 = vrot.lane.b32.xlu0 %v853, 64
    %v859 = vpop.permute.xlu0 %858
    %v861 = vmul.f32 %v855, %v859
    %863 = vrot.lane.b32.xlu0 %v861, 32
    %v864 = vpop.permute.xlu0 %863
    %v866 = vadd.f32 %v856, %v864
    %v867 = vtanh.pop %v866
    %869 = vrot.lane.b32.xlu0 %v867, 64
    %v870 = vpop.permute.xlu0 %869
    %v872 = vmul.f32 %v855, %v870
    %874 = vrot.lane.b32.xlu0 %v872, 32
    %v875 = vpop.permute.xlu0 %874
    %877 = vst.msk [vmem:[#allocation3 + $0xa] sm:$0x3] %vm190, %v875
    %v878 = vld [vmem:[#allocation2 + $0xc] sm:$0x3]
    %v879 = vsel %vm141, %v875, 0
    %881 = vmatpush.msra.mxu0 0.0
    %882 = vmatpush.msra.mxu0 0.0
    %883 = vmatpush.msra.mxu0 0.0
    %884 = vmatpush.msra.mxu0 0.0
    %885 = vmatpush.msra.mxu0 0.0
    %886 = vmatpush.msra.mxu0 0.0
    %887 = vmatpush.msra.mxu0 0.0
    %888 = vmatpush.msra.mxu0 0.0
    %889 = vmatpush.msra.mxu0 0.0
    %890 = vmatpush.msra.mxu0 0.0
    %891 = vmatpush.msra.mxu0 0.0
    %892 = vmatpush.msra.mxu0 0.0
    %893 = vmatpush.msra.mxu0 %v585
    %894 = vmatpush.msra.mxu0 %v584
    %895 = vmatpush.msra.mxu0 %v583
    %896 = vmatpush.msra.mxu0 %v582
    %897 = vmatmul.f32.gmra.mxu0 %v879
    %v898 = vpop.f32.mrf.mxu0
    %v899 = vadd.f32 0.0, %v898
    %900 = vdwg.mxu0
    %v901 = vadd.f32 %v878, %v899
    %v902 = vtanh.pop %v901
    %v903 = vmul.f32 %v902, 0.5
    %v904 = vadd.f32 %v903, 0.5
    %v905 = vmul.f32 %v904, %v866
    %907 = vrot.lane.b32.xlu0 %v902, 64
    %v908 = vpop.permute.xlu0 %907
    %v910 = vmul.f32 %v904, %v908
    %912 = vrot.lane.b32.xlu0 %v910, 32
    %v913 = vpop.permute.xlu0 %912
    %v915 = vadd.f32 %v905, %v913
    %v916 = vtanh.pop %v915
    %918 = vrot.lane.b32.xlu0 %v916, 64
    %v919 = vpop.permute.xlu0 %918
    %v921 = vmul.f32 %v904, %v919
    %923 = vrot.lane.b32.xlu0 %v921, 32
    %v924 = vpop.permute.xlu0 %923
    %926 = vst.msk [vmem:[#allocation3 + $0xc] sm:$0x3] %vm190, %v924
    %v927 = vld [vmem:[#allocation2 + $0xe] sm:$0x3]
    %v928 = vsel %vm141, %v924, 0
    %930 = vmatpush.msra.mxu0 0.0
    %931 = vmatpush.msra.mxu0 0.0
    %932 = vmatpush.msra.mxu0 0.0
    %933 = vmatpush.msra.mxu0 0.0
    %934 = vmatpush.msra.mxu0 0.0
    %935 = vmatpush.msra.mxu0 0.0
    %936 = vmatpush.msra.mxu0 0.0
    %937 = vmatpush.msra.mxu0 0.0
    %938 = vmatpush.msra.mxu0 0.0
    %939 = vmatpush.msra.mxu0 0.0
    %940 = vmatpush.msra.mxu0 0.0
    %941 = vmatpush.msra.mxu0 0.0
    %942 = vmatpush.msra.mxu0 %v585
    %943 = vmatpush.msra.mxu0 %v584
    %944 = vmatpush.msra.mxu0 %v583
    %945 = vmatpush.msra.mxu0 %v582
    %946 = vmatmul.f32.gmra.mxu0 %v928
    %v947 = vpop.f32.mrf.mxu0
    %v948 = vadd.f32 0.0, %v947
    %949 = vdwg.mxu0
    %v950 = vadd.f32 %v927, %v948
    %v951 = vtanh.pop %v950
    %v952 = vmul.f32 %v951, 0.5
    %v953 = vadd.f32 %v952, 0.5
    %v954 = vmul.f32 %v953, %v915
    %956 = vrot.lane.b32.xlu0 %v951, 64
    %v957 = vpop.permute.xlu0 %956
    %v959 = vmul.f32 %v953, %v957
    %961 = vrot.lane.b32.xlu0 %v959, 32
    %v962 = vpop.permute.xlu0 %961
    %v964 = vadd.f32 %v954, %v962
    %v965 = vtanh.pop %v964
    %967 = vrot.lane.b32.xlu0 %v965, 64
    %v968 = vpop.permute.xlu0 %967
    %v970 = vmul.f32 %v953, %v968
    %972 = vrot.lane.b32.xlu0 %v970, 32
    %v973 = vpop.permute.xlu0 %972
    %975 = vst.msk [vmem:[#allocation3 + $0xe] sm:$0x3] %vm190, %v973
    %v976 = vld [vmem:[%s7] sm:$0x1]
    %v977 = vld [vmem:[#allocation3] sm:$0xff]
    %v978 = vld [vmem:[#allocation3 + $0x8] sm:$0xff]
    %v979 = vld [vmem:[#allocation4] sm:$0x1]
    %981 = vset.pattern.permute.xlu0 0
    %982 = vperm.xlu0 %981, %v979
    %v983 = vpop.permute.xlu0 %982
    %v985 = vperm.slane %v983, 0
    %v987 = vsel %vm141, %v976, 0
    %v990 = vsel %vm141, %v977, 0
    %v993 = vsel %vm141, %v978, 0
    %995 = vmatpush.xpose.msra.mxu0 0.0
    %996 = vmatpush.xpose.msra.mxu0 0.0
    %997 = vmatpush.xpose.msra.mxu0 0.0
    %998 = vmatpush.xpose.msra.mxu0 0.0
    %999 = vmatpush.xpose.msra.mxu0 0.0
    %1000 = vmatpush.xpose.msra.mxu0 0.0
    %1001 = vmatpush.xpose.msra.mxu0 0.0
    %1002 = vmatpush.xpose.msra.mxu0 0.0
    %1003 = vmatpush.xpose.msra.mxu0 0.0
    %1004 = vmatpush.xpose.msra.mxu0 0.0
    %1005 = vmatpush.xpose.msra.mxu0 0.0
    %1006 = vmatpush.xpose.msra.mxu0 0.0
    %1007 = vmatpush.xpose.msra.mxu0 0.0
    %1008 = vmatpush.xpose.msra.mxu0 0.0
    %1009 = vmatpush.xpose.msra.mxu0 %v993
    %1010 = vmatpush.xpose.msra.mxu0 %v990
    %1011 = vmatmul.f32.gmra.mxu0 %v987
    %v1012 = vpop.f32.mrf.mxu0
    %v1013 = vadd.f32 %v985, %v1012
    %1014 = vdwg.mxu0
    %vm1015 = vcmask 122880
    %1016 = vst.msk [vmem:[%s9] sm:$0x1] %vm1015, %v1013
    // Predicated region
    $region50: #{_forward_impl.1} parent=1 // pred_check
      _
    $region51: #{_forward_impl.1} parent=1 // pred_check_branch
      %1018 = sbr.rel (0) target = $region53
    $region52: #{_forward_impl.1} parent=1 // pred_region
      _
    $region53: #{_forward_impl.1} parent=1 // pred_fallthru
      _
    // Predicated region
    $region54: #{_forward_impl.1} parent=1 // pred_check
      _
    $region55: #{_forward_impl.1} parent=1 // pred_check_branch
      %1020 = sbr.rel (0) target = $region57
    $region56: #{_forward_impl.1} parent=1 // pred_region
      _
    $region57: #{_forward_impl.1} parent=1 // pred_fallthru
      _
    %1021 = vsyncpa [#allocation6], 1
    %1022 = vsyncpa [#allocation8], 1

</llo_original>
